<compile_context>
chip_gen: v7x
topology: tpu7x:2x2x1
jax: 0.10.0
libtpu: 0.0.40
codegen_flags: <defaults>
</compile_context>

<pallas_src>
import jax
import jax.numpy as jnp
from jax.experimental import pallas as pl
from jax.experimental.pallas import tpu as pltpu


# ----------------------------------- helpers -------------------------------- #

_VMEM_LIMIT_CACHE = []


def _vmem_limit_bytes():
    """~60% of physical VMEM (v5e/v6e: ~76 MiB of 128; v7x: ~38 MiB of 64)."""
    if not _VMEM_LIMIT_CACHE:
        try:
            cap = int(pltpu.get_tpu_info().vmem_capacity_bytes)
        except Exception:
            cap = 128 * 1024 * 1024
        _VMEM_LIMIT_CACHE.append(
            max(32 * 1024 * 1024, min(96 * 1024 * 1024, (cap * 3) // 5)))
    return _VMEM_LIMIT_CACHE[0]


def _cparams(n_grid_axes):
    return pltpu.CompilerParams(
        dimension_semantics=("parallel",) * n_grid_axes,
        vmem_limit_bytes=_vmem_limit_bytes(),
    )


def _pick_row_tile(M, target=512):
    """Largest divisor of M <= target, preferring sublane-aligned (mult of 8)."""
    if M <= target:
        return M
    t = target - (target % 8)
    while t >= 8:                       # sublane-aligned divisors first
        if M % t == 0:
            return t
        t -= 8
    t = target
    while t >= 1:                       # any divisor (non-pow2 M safe)
        if M % t == 0:
            return t
        t -= 1
    return M


def _pick_strip(H, target=8):
    """Largest divisor of H <= target (bounds the conv kernel's VMEM working set)."""
    for s in range(min(H, target), 0, -1):
        if H % s == 0:
            return s
    return H


# ----------------------------- fc1: matmul + bias --------------------------- #

def _matmul_bias_kernel(a_ref, b_ref, bias_ref, o_ref):
    a = a_ref[...]
    if a.dtype != jnp.bfloat16:          # per-tile cast only; weight is pre-cast
        a = a.astype(jnp.bfloat16)
    acc = jnp.dot(a, b_ref[...], preferred_element_type=jnp.float32)
    acc = acc + bias_ref[...]            # f32 bias on the f32 accumulator
    o_ref[...] = acc.astype(o_ref.dtype)


def matmul_bias(a, b_bf16, bias, out_dtype=jnp.bfloat16):
    """(M, K) @ (K, N) + bias(N): row-tiled parallel grid, bf16 MXU, f32 acc."""
    M, K = a.shape
    N = b_bf16.shape[1]
    tm = _pick_row_tile(M)
    return pl.pallas_call(
        _matmul_bias_kernel,
        out_shape=jax.ShapeDtypeStruct((M, N), out_dtype),
        grid_spec=pltpu.PrefetchScalarGridSpec(
            num_scalar_prefetch=0,
            grid=(M // tm,),
            in_specs=[
                pl.BlockSpec((tm, K), lambda i: (i, 0)),
                # Resident weight (constant index_map).  On v7x this block could
                # additionally use pipeline_mode=pl.Buffered(1) to skip double
                # buffering and reclaim VMEM for larger activation tiles.
                pl.BlockSpec((K, N), lambda i: (0, 0)),
                pl.BlockSpec((1, N), lambda i: (0, 0)),
            ],
            out_specs=pl.BlockSpec((tm, N), lambda i: (i, 0)),
        ),
        compiler_params=_cparams(1),
    )(a, b_bf16, bias.reshape(1, N).astype(jnp.float32))


# --------------- fused depthwise 3x3 conv + bias + GELU + fc2 --------------- #

def _dwconv_gelu_fc2_kernel(x_ref, top_ref, bot_ref, wdw_ref, bdw_ref,
                            w2_ref, b2_ref, o_ref):
    """Processes one (strip, W) row-band of one image.

    x_ref   : (strip, W, C) bf16  fc1-output rows owned by this grid step
    top_ref : (1, W, C)     bf16  row above the strip (border-clamped, masked)
    bot_ref : (1, W, C)     bf16  row below the strip (border-clamped, masked)
    wdw_ref : (3, 3, C) f32  depthwise weights    bdw_ref : (1, 1, C) f32
    w2_ref  : (C, dim) bf16  fc2 weight           b2_ref  : (1, dim) f32
    o_ref   : (strip, W, dim)  final MixFFN output rows
    """
    strip, W, C = x_ref.shape
    dim = o_ref.shape[-1]
    s = pl.program_id(1)
    last = pl.num_programs(1) - 1

    # H-halo'd strip in f32 (accumulation precision); halo rows come from
    # clamped index_maps and are zeroed at the image border.
    top = jnp.where(s > 0, top_ref[...].astype(jnp.float32), 0.0)
    bot = jnp.where(s < last, bot_ref[...].astype(jnp.float32), 0.0)
    xc = jnp.concatenate([top, x_ref[...].astype(jnp.float32), bot], axis=0)

    # W-halo: build the two shifted copies ONCE (hoisted out of the tap loop;
    # only free leading-dim slices remain inside the dh loop).
    zcol = jnp.zeros((strip + 2, 1, C), jnp.float32)
    xm = jnp.concatenate([zcol, xc[:, :W - 1, :]], axis=1)   # x[.., w-1, :]
    xp = jnp.concatenate([xc[:, 1:, :], zcol], axis=1)       # x[.., w+1, :]

    w = wdw_ref[...].astype(jnp.float32)                     # (3, 3, C), hoisted
    acc = jnp.zeros((strip, W, C), jnp.float32)
    for dh in range(3):                                      # leading-dim slices are free
        acc = acc + xm[dh:dh + strip] * w[dh, 0]
        acc = acc + xc[dh:dh + strip] * w[dh, 1]
        acc = acc + xp[dh:dh + strip] * w[dh, 2]
    acc = acc + bdw_ref[...].astype(jnp.float32)

    # exact (erf-based) GELU, matching torch.nn.GELU default
    acc = 0.5 * acc * (1.0 + jax.lax.erf(acc * 0.7071067811865476))

    # fused fc2 epilogue: the hidden-width activation never leaves VMEM.
    g = acc.reshape(strip * W, C).astype(jnp.bfloat16)
    out = jnp.dot(g, w2_ref[...], preferred_element_type=jnp.float32)
    out = out + b2_ref[...]
    o_ref[...] = out.reshape(strip, W, dim).astype(o_ref.dtype)


def dwconv_gelu_fc2(x_img, dw_w, dw_b, fc2_w_bf16, fc2_b, out_dtype=jnp.float32):
    """Depthwise 3x3 (stride 1, pad 1) + bias + GELU + fc2, strip-tiled over H.

    x_img: (B, H, W, C) bf16.  Returns (B, H, W, dim) in out_dtype.
    """
    B, H, W, C = x_img.shape
    dim = fc2_w_bf16.shape[1]
    strip = _pick_strip(H)
    n_strips = H // strip

    def x_map(b, s):
        return (b, s, 0, 0)

    def top_map(b, s):                       # row above the strip, clamped at 0
        return (b, jnp.maximum(s * strip - 1, 0), 0, 0)

    def bot_map(b, s):                       # row below the strip, clamped at H-1
        return (b, jnp.minimum((s + 1) * strip, H - 1), 0, 0)

    return pl.pallas_call(
        _dwconv_gelu_fc2_kernel,
        out_shape=jax.ShapeDtypeStruct((B, H, W, dim), out_dtype),
        grid_spec=pltpu.PrefetchScalarGridSpec(
            num_scalar_prefetch=0,
            grid=(B, n_strips),
            in_specs=[
                pl.BlockSpec((pl.Squeezed(), strip, W, C), x_map),
                pl.BlockSpec((pl.Squeezed(), 1, W, C), top_map),
                pl.BlockSpec((pl.Squeezed(), 1, W, C), bot_map),
                pl.BlockSpec((3, 3, C), lambda b, s: (0, 0, 0)),
                pl.BlockSpec((1, 1, C), lambda b, s: (0, 0, 0)),
                pl.BlockSpec((C, dim), lambda b, s: (0, 0)),
                pl.BlockSpec((1, dim), lambda b, s: (0, 0)),
            ],
            out_specs=pl.BlockSpec((pl.Squeezed(), strip, W, dim), x_map),
        ),
        compiler_params=_cparams(2),
    )(x_img, x_img, x_img,                      # same buffer, three halo views
      dw_w.astype(jnp.float32),
      dw_b.reshape(1, 1, C).astype(jnp.float32),
      fc2_w_bf16,
      fc2_b.reshape(1, dim).astype(jnp.float32))


# ------------------------------- MixFFN forward ------------------------------ #

def mixffn_forward(x, H, W, params):
    """MixFFN.forward(x, H, W).  x: (B, N, C) with N == H*W.

    params (kernel layout; mapping from torch):
      fc1_w (C, hidden)    bf16  = fc1.weight.T        fc1_b (hidden,) f32
      dw_w  (3, 3, hidden) f32   = dwconv.weight[:,0].permute(1,2,0)
      dw_b  (hidden,)      f32
      fc2_w (hidden, C)    bf16  = fc2.weight.T        fc2_b (C,) f32
    """
    B, N, C = x.shape
    hidden = params['fc1_w'].shape[1]
    # fc1: bf16 activations/weights on the MXU, f32 accumulate, bf16 HBM output
    h = matmul_bias(x.reshape(B * N, C).astype(jnp.bfloat16),
                    params['fc1_w'], params['fc1_b'], out_dtype=jnp.bfloat16)
    # transpose(1,2).view(B,-1,H,W) in NCHW  <=>  (B, H, W, hidden) in NHWC
    h_img = h.reshape(B, H, W, hidden)
    # depthwise conv + bias + GELU + fc2, fully fused (GELU and the per-token
    # fc2 both commute with the token<->image reshape).
    out = dwconv_gelu_fc2(h_img, params['dw_w'], params['dw_b'],
                          params['fc2_w'], params['fc2_b'], out_dtype=x.dtype)
    return out.reshape(B, N, C)


# ----------------------------------- main ------------------------------------ #

if __name__ == "__main__":
    B, H, W, dim = 2, 16, 16, 32
    N = H * W
    hidden = dim * 4  # 128 -> lane-aligned channel dim for the conv / matmuls

    key = jax.random.PRNGKey(0)
    k_x, k_fc1, k_dw, k_fc2 = jax.random.split(key, 4)
    x = jax.random.normal(k_x, (B, N, dim), dtype=jnp.float32)
    params = {
        'fc1_w': (0.02 * jax.random.normal(k_fc1, (dim, hidden), jnp.float32)
                  ).astype(jnp.bfloat16),
        'fc1_b': jnp.zeros((hidden,), jnp.float32),
        'dw_w': 0.02 * jax.random.normal(k_dw, (3, 3, hidden), jnp.float32),
        'dw_b': jnp.zeros((hidden,), jnp.float32),
        'fc2_w': (0.02 * jax.random.normal(k_fc2, (hidden, dim), jnp.float32)
                  ).astype(jnp.bfloat16),
        'fc2_b': jnp.zeros((dim,), jnp.float32),
    }

    fwd = jax.jit(mixffn_forward, static_argnums=(1, 2))
    out = fwd(x, H, W, params)
    jax.block_until_ready(out)
    assert out.shape == (B, N, dim), out.shape
    print("KERNEL_OK")
</pallas_src>

<mosaic_0001>
module attributes {stable_mosaic.version = 11 : i64} {
  func.func @_matmul_bias_kernel(%arg0: i32, %arg1: memref<512x32xbf16, #tpu.memory_space<vmem>>, %arg2: memref<32x128xbf16, #tpu.memory_space<vmem>>, %arg3: memref<1x128xf32, #tpu.memory_space<vmem>>, %arg4: memref<512x128xbf16, #tpu.memory_space<vmem>>) attributes {dimension_semantics = [#tpu.dimension_semantics<parallel>], iteration_bounds = array<i64: 1>, scalar_prefetch = 0 : i64, scratch_operands = 0 : i64, tpu.core_type = #tpu.core_type<tc>, window_params = [{transform_indices = @transform_0, window_bounds = array<i64: 512, 32>}, {pipeline_mode = #tpu.pipeline_mode<synchronous>, transform_indices = @transform_1, window_bounds = array<i64: 32, 128>}, {pipeline_mode = #tpu.pipeline_mode<synchronous>, transform_indices = @transform_2, window_bounds = array<i64: 1, 128>}, {transform_indices = @transform_3, window_bounds = array<i64: 512, 128>}]} {
    %c0 = arith.constant 0 : index
    %c0_0 = arith.constant 0 : index
    %0 = vector.load %arg1[%c0, %c0_0] : memref<512x32xbf16, #tpu.memory_space<vmem>>, vector<512x32xbf16>
    %c0_1 = arith.constant 0 : index
    %c0_2 = arith.constant 0 : index
    %1 = vector.load %arg2[%c0_1, %c0_2] : memref<32x128xbf16, #tpu.memory_space<vmem>>, vector<32x128xbf16>
    %cst = arith.constant dense<0.000000e+00> : vector<512x128xf32>
    %2 = tpu.matmul %0, %1, %cst {dimension_numbers = #tpu.dot_dimension_numbers<[1], [0], [0], [1], [0, 0, 1, 1], [], []>} : vector<512x32xbf16>, vector<32x128xbf16>, vector<512x128xf32> -> vector<512x128xf32>
    %c0_3 = arith.constant 0 : index
    %c0_4 = arith.constant 0 : index
    %3 = vector.load %arg3[%c0_3, %c0_4] : memref<1x128xf32, #tpu.memory_space<vmem>>, vector<1x128xf32>
    %4 = vector.broadcast %3 : vector<1x128xf32> to vector<512x128xf32>
    %5 = arith.addf %2, %4 : vector<512x128xf32>
    %6 = arith.truncf %5 : vector<512x128xf32> to vector<512x128xbf16>
    %c0_5 = arith.constant 0 : index
    %c0_6 = arith.constant 0 : index
    %7 = vector.load %arg4[%c0_5, %c0_6] : memref<512x128xbf16, #tpu.memory_space<vmem>>, vector<512x128xbf16>
    tpu.vector_store %arg4[%c0_5, %c0_6], %6 {strides = array<i32>} : memref<512x128xbf16, #tpu.memory_space<vmem>>, vector<512x128xbf16>,
    return
  }
  func.func @transform_0(%arg0: i32) -> (i32, i32) {
    %c0_i32 = arith.constant 0 : i32
    %c0_i32_0 = arith.constant 0 : i32
    return %arg0, %c0_i32 : i32, i32
  }
  func.func @transform_1(%arg0: i32) -> (i32, i32) {
    %c0_i32 = arith.constant 0 : i32
    %c0_i32_0 = arith.constant 0 : i32
    %c0_i32_1 = arith.constant 0 : i32
    return %c0_i32, %c0_i32_0 : i32, i32
  }
  func.func @transform_2(%arg0: i32) -> (i32, i32) {
    %c0_i32 = arith.constant 0 : i32
    %c0_i32_0 = arith.constant 0 : i32
    %c0_i32_1 = arith.constant 0 : i32
    return %c0_i32, %c0_i32_0 : i32, i32
  }
  func.func @transform_3(%arg0: i32) -> (i32, i32) {
    %c0_i32 = arith.constant 0 : i32
    %c0_i32_0 = arith.constant 0 : i32
    return %arg0, %c0_i32 : i32, i32
  }
}

module attributes {stable_mosaic.version = 11 : i64} {
  func.func @_dwconv_gelu_fc2_kernel(%arg0: i32, %arg1: i32, %arg2: memref<1x8x16x128xbf16, #tpu.memory_space<vmem>>, %arg3: memref<1x1x16x128xbf16, #tpu.memory_space<vmem>>, %arg4: memref<1x1x16x128xbf16, #tpu.memory_space<vmem>>, %arg5: memref<3x3x128xf32, #tpu.memory_space<vmem>>, %arg6: memref<1x1x128xf32, #tpu.memory_space<vmem>>, %arg7: memref<128x32xbf16, #tpu.memory_space<vmem>>, %arg8: memref<1x32xf32, #tpu.memory_space<vmem>>, %arg9: memref<1x8x16x32xf32, #tpu.memory_space<vmem>>) attributes {dimension_semantics = [#tpu.dimension_semantics<parallel>, #tpu.dimension_semantics<parallel>], iteration_bounds = array<i64: 2, 2>, scalar_prefetch = 0 : i64, scratch_operands = 0 : i64, tpu.core_type = #tpu.core_type<tc>, window_params = [{transform_indices = @transform_0, window_bounds = array<i64: 1, 8, 16, 128>}, {transform_indices = @transform_1, window_bounds = array<i64: 1, 1, 16, 128>}, {transform_indices = @transform_2, window_bounds = array<i64: 1, 1, 16, 128>}, {pipeline_mode = #tpu.pipeline_mode<synchronous>, transform_indices = @transform_3, window_bounds = array<i64: 3, 3, 128>}, {pipeline_mode = #tpu.pipeline_mode<synchronous>, transform_indices = @transform_4, window_bounds = array<i64: 1, 1, 128>}, {pipeline_mode = #tpu.pipeline_mode<synchronous>, transform_indices = @transform_5, window_bounds = array<i64: 128, 32>}, {pipeline_mode = #tpu.pipeline_mode<synchronous>, transform_indices = @transform_6, window_bounds = array<i64: 1, 32>}, {transform_indices = @transform_7, window_bounds = array<i64: 1, 8, 16, 32>}]} {
    %c0_i32 = arith.constant 0 : i32
    %0 = arith.cmpi sgt, %arg1, %c0_i32 : i32
    %c0 = arith.constant 0 : index
    %c0_0 = arith.constant 0 : index
    %c0_1 = arith.constant 0 : index
    %c0_2 = arith.constant 0 : index
    %1 = vector.load %arg3[%c0, %c0_0, %c0_1, %c0_2] : memref<1x1x16x128xbf16, #tpu.memory_space<vmem>>, vector<1x1x16x128xbf16>
    %2 = vector.shape_cast %1 : vector<1x1x16x128xbf16> to vector<1x16x128xbf16>
    %3 = arith.extf %2 : vector<1x16x128xbf16> to vector<1x16x128xf32>
    %cst = arith.constant 0.000000e+00 : f32
    %4 = vector.broadcast %cst : f32 to vector<1x16x128xf32>
    %5 = arith.select %0, %3, %4 : vector<1x16x128xf32>
    %c1_i32 = arith.constant 1 : i32
    %6 = arith.cmpi slt, %arg1, %c1_i32 : i32
    %c0_3 = arith.constant 0 : index
    %c0_4 = arith.constant 0 : index
    %c0_5 = arith.constant 0 : index
    %c0_6 = arith.constant 0 : index
    %7 = vector.load %arg4[%c0_3, %c0_4, %c0_5, %c0_6] : memref<1x1x16x128xbf16, #tpu.memory_space<vmem>>, vector<1x1x16x128xbf16>
    %8 = vector.shape_cast %7 : vector<1x1x16x128xbf16> to vector<1x16x128xbf16>
    %9 = arith.extf %8 : vector<1x16x128xbf16> to vector<1x16x128xf32>
    %cst_7 = arith.constant 0.000000e+00 : f32
    %10 = vector.broadcast %cst_7 : f32 to vector<1x16x128xf32>
    %11 = arith.select %6, %9, %10 : vector<1x16x128xf32>
    %c0_8 = arith.constant 0 : index
    %c0_9 = arith.constant 0 : index
    %c0_10 = arith.constant 0 : index
    %c0_11 = arith.constant 0 : index
    %12 = vector.load %arg2[%c0_8, %c0_9, %c0_10, %c0_11] : memref<1x8x16x128xbf16, #tpu.memory_space<vmem>>, vector<1x8x16x128xbf16>
    %13 = vector.shape_cast %12 : vector<1x8x16x128xbf16> to vector<8x16x128xbf16>
    %14 = arith.extf %13 : vector<8x16x128xbf16> to vector<8x16x128xf32>
    %15 = tpu.concatenate %5, %14, %11 in 0 : vector<1x16x128xf32>, vector<8x16x128xf32>, vector<1x16x128xf32> -> vector<10x16x128xf32>
    %cst_12 = arith.constant 0.000000e+00 : f32
    %16 = vector.broadcast %cst_12 : f32 to vector<10x1x128xf32>
    %17 = vector.extract_strided_slice %15 {offsets = [0, 0, 0], sizes = [10, 15, 128], strides = [1, 1, 1]} : vector<10x16x128xf32> to vector<10x15x128xf32>
    %18 = tpu.concatenate %16, %17 in 1 : vector<10x1x128xf32>, vector<10x15x128xf32> -> vector<10x16x128xf32>
    %19 = vector.extract_strided_slice %15 {offsets = [0, 1, 0], sizes = [10, 15, 128], strides = [1, 1, 1]} : vector<10x16x128xf32> to vector<10x15x128xf32>
    %20 = tpu.concatenate %19, %16 in 1 : vector<10x15x128xf32>, vector<10x1x128xf32> -> vector<10x16x128xf32>
    %c0_13 = arith.constant 0 : index
    %c0_14 = arith.constant 0 : index
    %c0_15 = arith.constant 0 : index
    %21 = vector.load %arg5[%c0_13, %c0_14, %c0_15] : memref<3x3x128xf32, #tpu.memory_space<vmem>>, vector<3x3x128xf32>
    %cst_16 = arith.constant 0.000000e+00 : f32
    %22 = vector.broadcast %cst_16 : f32 to vector<8x16x128xf32>
    %23 = vector.extract_strided_slice %18 {offsets = [0, 0, 0], sizes = [8, 16, 128], strides = [1, 1, 1]} : vector<10x16x128xf32> to vector<8x16x128xf32>
    %24 = vector.extract_strided_slice %21 {offsets = [0, 0, 0], sizes = [1, 1, 128], strides = [1, 1, 1]} : vector<3x3x128xf32> to vector<1x1x128xf32>
    %25 = vector.shape_cast %24 : vector<1x1x128xf32> to vector<128xf32>
    %26 = vector.shape_cast %25 : vector<128xf32> to vector<1x1x128xf32>
    %27 = vector.broadcast %26 : vector<1x1x128xf32> to vector<8x16x128xf32>
    %28 = arith.mulf %23, %27 : vector<8x16x128xf32>
    %29 = arith.addf %22, %28 : vector<8x16x128xf32>
    %30 = vector.extract_strided_slice %15 {offsets = [0, 0, 0], sizes = [8, 16, 128], strides = [1, 1, 1]} : vector<10x16x128xf32> to vector<8x16x128xf32>
    %31 = vector.extract_strided_slice %21 {offsets = [0, 1, 0], sizes = [1, 1, 128], strides = [1, 1, 1]} : vector<3x3x128xf32> to vector<1x1x128xf32>
    %32 = vector.shape_cast %31 : vector<1x1x128xf32> to vector<128xf32>
    %33 = vector.shape_cast %32 : vector<128xf32> to vector<1x1x128xf32>
    %34 = vector.broadcast %33 : vector<1x1x128xf32> to vector<8x16x128xf32>
    %35 = arith.mulf %30, %34 : vector<8x16x128xf32>
    %36 = arith.addf %29, %35 : vector<8x16x128xf32>
    %37 = vector.extract_strided_slice %20 {offsets = [0, 0, 0], sizes = [8, 16, 128], strides = [1, 1, 1]} : vector<10x16x128xf32> to vector<8x16x128xf32>
    %38 = vector.extract_strided_slice %21 {offsets = [0, 2, 0], sizes = [1, 1, 128], strides = [1, 1, 1]} : vector<3x3x128xf32> to vector<1x1x128xf32>
    %39 = vector.shape_cast %38 : vector<1x1x128xf32> to vector<128xf32>
    %40 = vector.shape_cast %39 : vector<128xf32> to vector<1x1x128xf32>
    %41 = vector.broadcast %40 : vector<1x1x128xf32> to vector<8x16x128xf32>
    %42 = arith.mulf %37, %41 : vector<8x16x128xf32>
    %43 = arith.addf %36, %42 : vector<8x16x128xf32>
    %44 = vector.extract_strided_slice %18 {offsets = [1, 0, 0], sizes = [8, 16, 128], strides = [1, 1, 1]} : vector<10x16x128xf32> to vector<8x16x128xf32>
    %45 = vector.extract_strided_slice %21 {offsets = [1, 0, 0], sizes = [1, 1, 128], strides = [1, 1, 1]} : vector<3x3x128xf32> to vector<1x1x128xf32>
    %46 = vector.shape_cast %45 : vector<1x1x128xf32> to vector<128xf32>
    %47 = vector.shape_cast %46 : vector<128xf32> to vector<1x1x128xf32>
    %48 = vector.broadcast %47 : vector<1x1x128xf32> to vector<8x16x128xf32>
    %49 = arith.mulf %44, %48 : vector<8x16x128xf32>
    %50 = arith.addf %43, %49 : vector<8x16x128xf32>
    %51 = vector.extract_strided_slice %15 {offsets = [1, 0, 0], sizes = [8, 16, 128], strides = [1, 1, 1]} : vector<10x16x128xf32> to vector<8x16x128xf32>
    %52 = vector.extract_strided_slice %21 {offsets = [1, 1, 0], sizes = [1, 1, 128], strides = [1, 1, 1]} : vector<3x3x128xf32> to vector<1x1x128xf32>
    %53 = vector.shape_cast %52 : vector<1x1x128xf32> to vector<128xf32>
    %54 = vector.shape_cast %53 : vector<128xf32> to vector<1x1x128xf32>
    %55 = vector.broadcast %54 : vector<1x1x128xf32> to vector<8x16x128xf32>
    %56 = arith.mulf %51, %55 : vector<8x16x128xf32>
    %57 = arith.addf %50, %56 : vector<8x16x128xf32>
    %58 = vector.extract_strided_slice %20 {offsets = [1, 0, 0], sizes = [8, 16, 128], strides = [1, 1, 1]} : vector<10x16x128xf32> to vector<8x16x128xf32>
    %59 = vector.extract_strided_slice %21 {offsets = [1, 2, 0], sizes = [1, 1, 128], strides = [1, 1, 1]} : vector<3x3x128xf32> to vector<1x1x128xf32>
    %60 = vector.shape_cast %59 : vector<1x1x128xf32> to vector<128xf32>
    %61 = vector.shape_cast %60 : vector<128xf32> to vector<1x1x128xf32>
    %62 = vector.broadcast %61 : vector<1x1x128xf32> to vector<8x16x128xf32>
    %63 = arith.mulf %58, %62 : vector<8x16x128xf32>
    %64 = arith.addf %57, %63 : vector<8x16x128xf32>
    %65 = vector.extract_strided_slice %18 {offsets = [2, 0, 0], sizes = [8, 16, 128], strides = [1, 1, 1]} : vector<10x16x128xf32> to vector<8x16x128xf32>
    %66 = vector.extract_strided_slice %21 {offsets = [2, 0, 0], sizes = [1, 1, 128], strides = [1, 1, 1]} : vector<3x3x128xf32> to vector<1x1x128xf32>
    %67 = vector.shape_cast %66 : vector<1x1x128xf32> to vector<128xf32>
    %68 = vector.shape_cast %67 : vector<128xf32> to vector<1x1x128xf32>
    %69 = vector.broadcast %68 : vector<1x1x128xf32> to vector<8x16x128xf32>
    %70 = arith.mulf %65, %69 : vector<8x16x128xf32>
    %71 = arith.addf %64, %70 : vector<8x16x128xf32>
    %72 = vector.extract_strided_slice %15 {offsets = [2, 0, 0], sizes = [8, 16, 128], strides = [1, 1, 1]} : vector<10x16x128xf32> to vector<8x16x128xf32>
    %73 = vector.extract_strided_slice %21 {offsets = [2, 1, 0], sizes = [1, 1, 128], strides = [1, 1, 1]} : vector<3x3x128xf32> to vector<1x1x128xf32>
    %74 = vector.shape_cast %73 : vector<1x1x128xf32> to vector<128xf32>
    %75 = vector.shape_cast %74 : vector<128xf32> to vector<1x1x128xf32>
    %76 = vector.broadcast %75 : vector<1x1x128xf32> to vector<8x16x128xf32>
    %77 = arith.mulf %72, %76 : vector<8x16x128xf32>
    %78 = arith.addf %71, %77 : vector<8x16x128xf32>
    %79 = vector.extract_strided_slice %20 {offsets = [2, 0, 0], sizes = [8, 16, 128], strides = [1, 1, 1]} : vector<10x16x128xf32> to vector<8x16x128xf32>
    %80 = vector.extract_strided_slice %21 {offsets = [2, 2, 0], sizes = [1, 1, 128], strides = [1, 1, 1]} : vector<3x3x128xf32> to vector<1x1x128xf32>
    %81 = vector.shape_cast %80 : vector<1x1x128xf32> to vector<128xf32>
    %82 = vector.shape_cast %81 : vector<128xf32> to vector<1x1x128xf32>
    %83 = vector.broadcast %82 : vector<1x1x128xf32> to vector<8x16x128xf32>
    %84 = arith.mulf %79, %83 : vector<8x16x128xf32>
    %85 = arith.addf %78, %84 : vector<8x16x128xf32>
    %c0_17 = arith.constant 0 : index
    %c0_18 = arith.constant 0 : index
    %c0_19 = arith.constant 0 : index
    %86 = vector.load %arg6[%c0_17, %c0_18, %c0_19] : memref<1x1x128xf32, #tpu.memory_space<vmem>>, vector<1x1x128xf32>
    %87 = vector.broadcast %86 : vector<1x1x128xf32> to vector<8x16x128xf32>
    %88 = arith.addf %85, %87 : vector<8x16x128xf32>
    %cst_20 = arith.constant 5.000000e-01 : f32
    %89 = vector.broadcast %cst_20 : f32 to vector<8x16x128xf32>
    %90 = arith.mulf %89, %88 : vector<8x16x128xf32>
    %cst_21 = arith.constant 0.707106769 : f32
    %91 = vector.broadcast %cst_21 : f32 to vector<8x16x128xf32>
    %92 = arith.mulf %88, %91 : vector<8x16x128xf32>
    %93 = math.erf %92 : vector<8x16x128xf32>
    %cst_22 = arith.constant 1.000000e+00 : f32
    %94 = vector.broadcast %cst_22 : f32 to vector<8x16x128xf32>
    %95 = arith.addf %94, %93 : vector<8x16x128xf32>
    %96 = arith.mulf %90, %95 : vector<8x16x128xf32>
    %97 = vector.shape_cast %96 : vector<8x16x128xf32> to vector<128x128xf32>
    %98 = arith.truncf %97 : vector<128x128xf32> to vector<128x128xbf16>
    %c0_23 = arith.constant 0 : index
    %c0_24 = arith.constant 0 : index
    %99 = vector.load %arg7[%c0_23, %c0_24] : memref<128x32xbf16, #tpu.memory_space<vmem>>, vector<128x32xbf16>
    %cst_25 = arith.constant dense<0.000000e+00> : vector<128x32xf32>
    %100 = tpu.matmul %98, %99, %cst_25 {dimension_numbers = #tpu.dot_dimension_numbers<[1], [0], [0], [1], [0, 0, 1, 1], [], []>} : vector<128x128xbf16>, vector<128x32xbf16>, vector<128x32xf32> -> vector<128x32xf32>
    %c0_26 = arith.constant 0 : index
    %c0_27 = arith.constant 0 : index
    %101 = vector.load %arg8[%c0_26, %c0_27] : memref<1x32xf32, #tpu.memory_space<vmem>>, vector<1x32xf32>
    %102 = vector.broadcast %101 : vector<1x32xf32> to vector<128x32xf32>
    %103 = arith.addf %100, %102 : vector<128x32xf32>
    %104 = vector.shape_cast %103 : vector<128x32xf32> to vector<8x16x32xf32>
    %c0_28 = arith.constant 0 : index
    %c0_29 = arith.constant 0 : index
    %c0_30 = arith.constant 0 : index
    %c0_31 = arith.constant 0 : index
    %105 = vector.load %arg9[%c0_28, %c0_29, %c0_30, %c0_31] : memref<1x8x16x32xf32, #tpu.memory_space<vmem>>, vector<1x8x16x32xf32>
    %106 = vector.shape_cast %105 : vector<1x8x16x32xf32> to vector<8x16x32xf32>
    %107 = vector.shape_cast %104 : vector<8x16x32xf32> to vector<1x8x16x32xf32>
    tpu.vector_store %arg9[%c0_28, %c0_29, %c0_30, %c0_31], %107 {strides = array<i32>} : memref<1x8x16x32xf32, #tpu.memory_space<vmem>>, vector<1x8x16x32xf32>,
    return
  }
  func.func @transform_0(%arg0: i32, %arg1: i32) -> (i32, i32, i32, i32) {
    %c0_i32 = arith.constant 0 : i32
    %c0_i32_0 = arith.constant 0 : i32
    %c0_i32_1 = arith.constant 0 : i32
    return %arg0, %arg1, %c0_i32, %c0_i32_0 : i32, i32, i32, i32
  }
  func.func @transform_1(%arg0: i32, %arg1: i32) -> (i32, i32, i32, i32) {
    %c8_i32 = arith.constant 8 : i32
    %0 = arith.muli %arg1, %c8_i32 : i32
    %c1_i32 = arith.constant 1 : i32
    %1 = arith.subi %0, %c1_i32 : i32
    %c0_i32 = arith.constant 0 : i32
    %2 = arith.maxsi %1, %c0_i32 : i32
    %c0_i32_0 = arith.constant 0 : i32
    %c0_i32_1 = arith.constant 0 : i32
    %c0_i32_2 = arith.constant 0 : i32
    return %arg0, %2, %c0_i32_0, %c0_i32_1 : i32, i32, i32, i32
  }
  func.func @transform_2(%arg0: i32, %arg1: i32) -> (i32, i32, i32, i32) {
    %c1_i32 = arith.constant 1 : i32
    %0 = arith.addi %arg1, %c1_i32 : i32
    %c8_i32 = arith.constant 8 : i32
    %1 = arith.muli %0, %c8_i32 : i32
    %c15_i32 = arith.constant 15 : i32
    %2 = arith.minsi %1, %c15_i32 : i32
    %c0_i32 = arith.constant 0 : i32
    %c0_i32_0 = arith.constant 0 : i32
    %c0_i32_1 = arith.constant 0 : i32
    return %arg0, %2, %c0_i32, %c0_i32_0 : i32, i32, i32, i32
  }
  func.func @transform_3(%arg0: i32, %arg1: i32) -> (i32, i32, i32) {
    %c0_i32 = arith.constant 0 : i32
    %c0_i32_0 = arith.constant 0 : i32
    %c0_i32_1 = arith.constant 0 : i32
    %c0_i32_2 = arith.constant 0 : i32
    return %c0_i32, %c0_i32_0, %c0_i32_1 : i32, i32, i32
  }
  func.func @transform_4(%arg0: i32, %arg1: i32) -> (i32, i32, i32) {
    %c0_i32 = arith.constant 0 : i32
    %c0_i32_0 = arith.constant 0 : i32
    %c0_i32_1 = arith.constant 0 : i32
    %c0_i32_2 = arith.constant 0 : i32
    return %c0_i32, %c0_i32_0, %c0_i32_1 : i32, i32, i32
  }
  func.func @transform_5(%arg0: i32, %arg1: i32) -> (i32, i32) {
    %c0_i32 = arith.constant 0 : i32
    %c0_i32_0 = arith.constant 0 : i32
    %c0_i32_1 = arith.constant 0 : i32
    return %c0_i32, %c0_i32_0 : i32, i32
  }
  func.func @transform_6(%arg0: i32, %arg1: i32) -> (i32, i32) {
    %c0_i32 = arith.constant 0 : i32
    %c0_i32_0 = arith.constant 0 : i32
    %c0_i32_1 = arith.constant 0 : i32
    return %c0_i32, %c0_i32_0 : i32, i32
  }
  func.func @transform_7(%arg0: i32, %arg1: i32) -> (i32, i32, i32, i32) {
    %c0_i32 = arith.constant 0 : i32
    %c0_i32_0 = arith.constant 0 : i32
    %c0_i32_1 = arith.constant 0 : i32
    return %arg0, %arg1, %c0_i32, %c0_i32_0 : i32, i32, i32, i32
  }
}

</mosaic_0001>

<llo_original>
// kernel: mixffn_forward.2
$region0: #{mixffn_forward.2}
  #allocation0 [shape = 'u32[]', space=smem, size = 0x4, offset = 0x4, fixed_abs, tag = 'smem constant byte address 0x4 - core index']
  #allocation1 [shape = 'u32[144,128]{1,0:T(1,128)}', space=vmem, size = 0x12000, scoped, tag = 'internal scratch']
  %s0 = inlined_call_operand.hbm [shape: bf16[512,32], index: 0, kind: input, shape index: {}]
  %s1 = inlined_call_operand.hbm [shape: bf16[32,128], index: 1, kind: input, shape index: {}]
  %s2 = inlined_call_operand.hbm [shape: f32[1,128], index: 2, kind: input, shape index: {}]
  %s3 = inlined_call_operand.hbm [shape: bf16[512,128], index: 3, kind: output, shape index: {}]
  %s4 = sld [smem:[#allocation0]]
  $region34: #{mixffn_forward.2} parent=0
    _
  %s6 = ssub.s32 1, %s4
  %s7 = scalar_select 0, %s6, %s4
  $region1: #{mixffn_forward.2} parent=0
    #allocation2 [shape = 'u8[131072]{0}', space=vmem, size = 0x20000, scoped, tag = 'input window, operand 0, single buffered']
    #allocation3 [shape = 's32[1]{0}', space=sflag, size = 0x4, scoped, tag = 'scoped memory for mixffn_forward.2']
    #allocation4 [shape = 's32[1]{0}', space=sflag, size = 0x4, scoped, tag = 'scoped memory for mixffn_forward.2']
    #allocation5 [shape = 'u8[8192]{0}', space=vmem, size = 0x2000, scoped, tag = 'input window, operand 1, single buffered']
    #allocation6 [shape = 's32[1]{0}', space=sflag, size = 0x4, scoped, tag = 'scoped memory for mixffn_forward.2']
    #allocation7 [shape = 'u8[512]{0}', space=vmem, size = 0x400, scoped, tag = 'input window, operand 2, single buffered']
    #allocation8 [shape = 'u8[131072]{0}', space=vmem, size = 0x20000, scoped, tag = 'output window, operand 0, single buffered']
    %8 = vsyncpa [#allocation3], 0
    %9 = vsyncpa [#allocation6], 0
    %10 = vsyncpa [#allocation4], 0
    // Predicated region
    $region2: #{mixffn_forward.2} parent=1 // pred_check
      _
    $region3: #{mixffn_forward.2} parent=1 // pred_check_branch
      %12 = sbr.rel (0) target = $region5
    $region4: #{mixffn_forward.2} parent=1 // pred_region
      %s14 = ssub.s32 4096, 4096
      %15 = vsyncadd [#allocation3], %s14
      %s16 = sshll.u32 [#allocation2], 4
      %s17 = int_to_ptr.vmem [resolvable:$true] %s16
      %22 = dma.hbm_to_vmem [thread:$0]  %s0, 4096, %s17, [#allocation3], 64, 64, 4
    $region5: #{mixffn_forward.2} parent=1 // pred_fallthru
      _
    // Predicated region
    $region6: #{mixffn_forward.2} parent=1 // pred_check
      _
    $region7: #{mixffn_forward.2} parent=1 // pred_check_branch
      %24 = sbr.rel (0) target = $region9
    $region8: #{mixffn_forward.2} parent=1 // pred_region
      %s26 = ssub.s32 256, 256
      %27 = vsyncadd [#allocation6], %s26
      %s28 = sshll.u32 [#allocation5], 4
      %s29 = int_to_ptr.vmem [resolvable:$true] %s28
      %34 = dma.hbm_to_vmem [thread:$0]  %s1, 256, %s29, [#allocation6], 64, 64, 4
    $region9: #{mixffn_forward.2} parent=1 // pred_fallthru
      _
    // Predicated region
    $region10: #{mixffn_forward.2} parent=1 // pred_check
      _
    $region11: #{mixffn_forward.2} parent=1 // pred_check_branch
      %36 = sbr.rel (0) target = $region13
    $region12: #{mixffn_forward.2} parent=1 // pred_region
      %s38 = ssub.s32 16, 16
      %39 = vsyncadd [#allocation6], %s38
      %s41 = sshll.u32 [#allocation7], 4
      %s42 = int_to_ptr.vmem [resolvable:$true] %s41
      %44 = dma.hbm_to_vmem [thread:$0]  %s2, 16, %s42, [#allocation6]
    $region13: #{mixffn_forward.2} parent=1 // pred_fallthru
      _
    // Predicated region
    $region14: #{mixffn_forward.2} parent=1 // pred_check
      _
    $region15: #{mixffn_forward.2} parent=1 // pred_check_branch
      %46 = sbr.rel (0) target = $region17
    $region16: #{mixffn_forward.2} parent=1 // pred_region
      %47 = dma.done [#allocation3], 4096
    $region17: #{mixffn_forward.2} parent=1 // pred_fallthru
      _
    // Predicated region
    $region18: #{mixffn_forward.2} parent=1 // pred_check
      _
    $region19: #{mixffn_forward.2} parent=1 // pred_check_branch
      %49 = sbr.rel (0) target = $region21
    $region20: #{mixffn_forward.2} parent=1 // pred_region
      %50 = dma.done [#allocation6], 256
    $region21: #{mixffn_forward.2} parent=1 // pred_fallthru
      _
    // Predicated region
    $region22: #{mixffn_forward.2} parent=1 // pred_check
      _
    $region23: #{mixffn_forward.2} parent=1 // pred_check_branch
      %52 = sbr.rel (0) target = $region25
    $region24: #{mixffn_forward.2} parent=1 // pred_region
      %53 = dma.done [#allocation6], 16
    $region25: #{mixffn_forward.2} parent=1 // pred_fallthru
      _
    %v55 = vld [vmem:[#allocation2] sm:$0xf]
    %v56 = vld [vmem:[#allocation2 + $0x4] sm:$0xf]
    %v57 = vld [vmem:[#allocation2 + $0x8] sm:$0xf]
    %v58 = vld [vmem:[#allocation2 + $0xc] sm:$0xf]
    %v59 = vld [vmem:[#allocation2 + $0x10] sm:$0xf]
    %v60 = vld [vmem:[#allocation2 + $0x14] sm:$0xf]
    %v61 = vld [vmem:[#allocation2 + $0x18] sm:$0xf]
    %v62 = vld [vmem:[#allocation2 + $0x1c] sm:$0xf]
    %v63 = vld [vmem:[#allocation2 + $0x20] sm:$0xf]
    %v64 = vld [vmem:[#allocation2 + $0x24] sm:$0xf]
    %v65 = vld [vmem:[#allocation2 + $0x28] sm:$0xf]
    %v66 = vld [vmem:[#allocation2 + $0x2c] sm:$0xf]
    %v67 = vld [vmem:[#allocation2 + $0x30] sm:$0xf]
    %v68 = vld [vmem:[#allocation2 + $0x34] sm:$0xf]
    %v69 = vld [vmem:[#allocation2 + $0x38] sm:$0xf]
    %v70 = vld [vmem:[#allocation2 + $0x3c] sm:$0xf]
    %v71 = vld [vmem:[#allocation2 + $0x40] sm:$0xf]
    %v72 = vld [vmem:[#allocation2 + $0x44] sm:$0xf]
    %v73 = vld [vmem:[#allocation2 + $0x48] sm:$0xf]
    %v74 = vld [vmem:[#allocation2 + $0x4c] sm:$0xf]
    %v75 = vld [vmem:[#allocation2 + $0x50] sm:$0xf]
    %v76 = vld [vmem:[#allocation2 + $0x54] sm:$0xf]
    %v77 = vld [vmem:[#allocation2 + $0x58] sm:$0xf]
    %v78 = vld [vmem:[#allocation2 + $0x5c] sm:$0xf]
    %v79 = vld [vmem:[#allocation2 + $0x60] sm:$0xf]
    %v80 = vld [vmem:[#allocation2 + $0x64] sm:$0xf]
    %v81 = vld [vmem:[#allocation2 + $0x68] sm:$0xf]
    %v82 = vld [vmem:[#allocation2 + $0x6c] sm:$0xf]
    %v83 = vld [vmem:[#allocation2 + $0x70] sm:$0xf]
    %v84 = vld [vmem:[#allocation2 + $0x74] sm:$0xf]
    %v85 = vld [vmem:[#allocation2 + $0x78] sm:$0xf]
    %v86 = vld [vmem:[#allocation2 + $0x7c] sm:$0xf]
    %v87 = vld [vmem:[#allocation2 + $0x80] sm:$0xf]
    %v88 = vld [vmem:[#allocation2 + $0x84] sm:$0xf]
    %v89 = vld [vmem:[#allocation2 + $0x88] sm:$0xf]
    %v90 = vld [vmem:[#allocation2 + $0x8c] sm:$0xf]
    %v91 = vld [vmem:[#allocation2 + $0x90] sm:$0xf]
    %v92 = vld [vmem:[#allocation2 + $0x94] sm:$0xf]
    %v93 = vld [vmem:[#allocation2 + $0x98] sm:$0xf]
    %v94 = vld [vmem:[#allocation2 + $0x9c] sm:$0xf]
    %v95 = vld [vmem:[#allocation2 + $0xa0] sm:$0xf]
    %v96 = vld [vmem:[#allocation2 + $0xa4] sm:$0xf]
    %v97 = vld [vmem:[#allocation2 + $0xa8] sm:$0xf]
    %v98 = vld [vmem:[#allocation2 + $0xac] sm:$0xf]
    %v99 = vld [vmem:[#allocation2 + $0xb0] sm:$0xf]
    %v100 = vld [vmem:[#allocation2 + $0xb4] sm:$0xf]
    %v101 = vld [vmem:[#allocation2 + $0xb8] sm:$0xf]
    %v102 = vld [vmem:[#allocation2 + $0xbc] sm:$0xf]
    %v103 = vld [vmem:[#allocation2 + $0xc0] sm:$0xf]
    %v104 = vld [vmem:[#allocation2 + $0xc4] sm:$0xf]
    %v105 = vld [vmem:[#allocation2 + $0xc8] sm:$0xf]
    %v106 = vld [vmem:[#allocation2 + $0xcc] sm:$0xf]
    %v107 = vld [vmem:[#allocation2 + $0xd0] sm:$0xf]
    %v108 = vld [vmem:[#allocation2 + $0xd4] sm:$0xf]
    %v109 = vld [vmem:[#allocation2 + $0xd8] sm:$0xf]
    %v110 = vld [vmem:[#allocation2 + $0xdc] sm:$0xf]
    %v111 = vld [vmem:[#allocation2 + $0xe0] sm:$0xf]
    %v112 = vld [vmem:[#allocation2 + $0xe4] sm:$0xf]
    %v113 = vld [vmem:[#allocation2 + $0xe8] sm:$0xf]
    %v114 = vld [vmem:[#allocation2 + $0xec] sm:$0xf]
    %v115 = vld [vmem:[#allocation2 + $0xf0] sm:$0xf]
    %v116 = vld [vmem:[#allocation2 + $0xf4] sm:$0xf]
    %v117 = vld [vmem:[#allocation2 + $0xf8] sm:$0xf]
    %v118 = vld [vmem:[#allocation2 + $0xfc] sm:$0xf]
    %v119 = vld [vmem:[#allocation5] sm:$0xf]
    %v120 = vld [vmem:[#allocation5 + $0x4] sm:$0xf]
    %v121 = vld [vmem:[#allocation5 + $0x8] sm:$0xf]
    %v122 = vld [vmem:[#allocation5 + $0xc] sm:$0xf]
    %v123 = vld [vmem:[#allocation7] sm:$0x1]
    %v125 = vlaneseq
    %v126 = vshrl.u32 %v125, 7
    %v127 = vsub.s32 0, %v126
    %v128 = vrot.slane %v123, %v127
    %v194 = vunpack.c.l.b16 %v55
    %v195 = vunpack.c.l.b16 %v56
    %v196 = vunpack.c.l.b16 %v57
    %v197 = vunpack.c.l.b16 %v58
    %v198 = vunpack.c.l.b16 %v59
    %v199 = vunpack.c.l.b16 %v60
    %v200 = vunpack.c.l.b16 %v61
    %v201 = vunpack.c.l.b16 %v62
    %v202 = vunpack.c.l.b16 %v63
    %v203 = vunpack.c.l.b16 %v64
    %v204 = vunpack.c.l.b16 %v65
    %v205 = vunpack.c.l.b16 %v66
    %v206 = vunpack.c.l.b16 %v67
    %v207 = vunpack.c.l.b16 %v68
    %v208 = vunpack.c.l.b16 %v69
    %v209 = vunpack.c.l.b16 %v70
    %v210 = vunpack.c.l.b16 %v71
    %v211 = vunpack.c.l.b16 %v72
    %v212 = vunpack.c.l.b16 %v73
    %v213 = vunpack.c.l.b16 %v74
    %v214 = vunpack.c.l.b16 %v75
    %v215 = vunpack.c.l.b16 %v76
    %v216 = vunpack.c.l.b16 %v77
    %v217 = vunpack.c.l.b16 %v78
    %v218 = vunpack.c.l.b16 %v79
    %v219 = vunpack.c.l.b16 %v80
    %v220 = vunpack.c.l.b16 %v81
    %v221 = vunpack.c.l.b16 %v82
    %v222 = vunpack.c.l.b16 %v83
    %v223 = vunpack.c.l.b16 %v84
    %v224 = vunpack.c.l.b16 %v85
    %v225 = vunpack.c.l.b16 %v86
    %v226 = vunpack.c.l.b16 %v87
    %v227 = vunpack.c.l.b16 %v88
    %v228 = vunpack.c.l.b16 %v89
    %v229 = vunpack.c.l.b16 %v90
    %v230 = vunpack.c.l.b16 %v91
    %v231 = vunpack.c.l.b16 %v92
    %v232 = vunpack.c.l.b16 %v93
    %v233 = vunpack.c.l.b16 %v94
    %v234 = vunpack.c.l.b16 %v95
    %v235 = vunpack.c.l.b16 %v96
    %v236 = vunpack.c.l.b16 %v97
    %v237 = vunpack.c.l.b16 %v98
    %v238 = vunpack.c.l.b16 %v99
    %v239 = vunpack.c.l.b16 %v100
    %v240 = vunpack.c.l.b16 %v101
    %v241 = vunpack.c.l.b16 %v102
    %v242 = vunpack.c.l.b16 %v103
    %v243 = vunpack.c.l.b16 %v104
    %v244 = vunpack.c.l.b16 %v105
    %v245 = vunpack.c.l.b16 %v106
    %v246 = vunpack.c.l.b16 %v107
    %v247 = vunpack.c.l.b16 %v108
    %v248 = vunpack.c.l.b16 %v109
    %v249 = vunpack.c.l.b16 %v110
    %v250 = vunpack.c.l.b16 %v111
    %v251 = vunpack.c.l.b16 %v112
    %v252 = vunpack.c.l.b16 %v113
    %v253 = vunpack.c.l.b16 %v114
    %v254 = vunpack.c.l.b16 %v115
    %v255 = vunpack.c.l.b16 %v116
    %v256 = vunpack.c.l.b16 %v117
    %v257 = vunpack.c.l.b16 %v118
    %v258 = vpack.c.b16 %v195, %v194
    %v259 = vpack.c.b16 %v197, %v196
    %v260 = vpack.c.b16 %v199, %v198
    %v261 = vpack.c.b16 %v201, %v200
    %v262 = vpack.c.b16 %v203, %v202
    %v263 = vpack.c.b16 %v205, %v204
    %v264 = vpack.c.b16 %v207, %v206
    %v265 = vpack.c.b16 %v209, %v208
    %v266 = vpack.c.b16 %v211, %v210
    %v267 = vpack.c.b16 %v213, %v212
    %v268 = vpack.c.b16 %v215, %v214
    %v269 = vpack.c.b16 %v217, %v216
    %v270 = vpack.c.b16 %v219, %v218
    %v271 = vpack.c.b16 %v221, %v220
    %v272 = vpack.c.b16 %v223, %v222
    %v273 = vpack.c.b16 %v225, %v224
    %v274 = vpack.c.b16 %v227, %v226
    %v275 = vpack.c.b16 %v229, %v228
    %v276 = vpack.c.b16 %v231, %v230
    %v277 = vpack.c.b16 %v233, %v232
    %v278 = vpack.c.b16 %v235, %v234
    %v279 = vpack.c.b16 %v237, %v236
    %v280 = vpack.c.b16 %v239, %v238
    %v281 = vpack.c.b16 %v241, %v240
    %v282 = vpack.c.b16 %v243, %v242
    %v283 = vpack.c.b16 %v245, %v244
    %v284 = vpack.c.b16 %v247, %v246
    %v285 = vpack.c.b16 %v249, %v248
    %v286 = vpack.c.b16 %v251, %v250
    %v287 = vpack.c.b16 %v253, %v252
    %v288 = vpack.c.b16 %v255, %v254
    %v289 = vpack.c.b16 %v257, %v256
    %v294 = vunpack.c.l.b16 %v119
    %v295 = vunpack.c.l.b16 %v120
    %v296 = vunpack.c.l.b16 %v121
    %v297 = vunpack.c.l.b16 %v122
    %v298 = vpack.c.b16 %v295, %v294
    %v299 = vpack.c.b16 %v297, %v296
    %vm302 = vcmask 261120
    %v304 = vsel %vm302, %v258, 0
    %v307 = vsel %vm302, %v259, 0
    %v310 = vsel %vm302, %v260, 0
    %v313 = vsel %vm302, %v261, 0
    %v316 = vsel %vm302, %v262, 0
    %v319 = vsel %vm302, %v263, 0
    %v322 = vsel %vm302, %v264, 0
    %v325 = vsel %vm302, %v265, 0
    %v328 = vsel %vm302, %v266, 0
    %v331 = vsel %vm302, %v267, 0
    %v334 = vsel %vm302, %v268, 0
    %v337 = vsel %vm302, %v269, 0
    %v340 = vsel %vm302, %v270, 0
    %v343 = vsel %vm302, %v271, 0
    %v346 = vsel %vm302, %v272, 0
    %v349 = vsel %vm302, %v273, 0
    %v352 = vsel %vm302, %v274, 0
    %v355 = vsel %vm302, %v275, 0
    %v358 = vsel %vm302, %v276, 0
    %v361 = vsel %vm302, %v277, 0
    %v364 = vsel %vm302, %v278, 0
    %v367 = vsel %vm302, %v279, 0
    %v370 = vsel %vm302, %v280, 0
    %v373 = vsel %vm302, %v281, 0
    %v376 = vsel %vm302, %v282, 0
    %v379 = vsel %vm302, %v283, 0
    %v382 = vsel %vm302, %v284, 0
    %v385 = vsel %vm302, %v285, 0
    %v388 = vsel %vm302, %v286, 0
    %v391 = vsel %vm302, %v287, 0
    %v394 = vsel %vm302, %v288, 0
    %v397 = vsel %vm302, %v289, 0
    %399 = vmatprep.subr.bf16.mxu0 0
    %400 = vmatpush1.bf16.msra.mxu0 %v298
    %401 = vmatprep.subr.bf16.mxu0 0
    %402 = vmatpush1.bf16.msra.mxu0 %v299
    %403 = vmatprep.subr.bf16.mxu0 0
    %404 = vmatpush1.bf16.msra.mxu0 0
    %405 = vmatprep.subr.bf16.mxu0 0
    %406 = vmatpush1.bf16.msra.mxu0 0
    %407 = vmatprep.subr.bf16.mxu0 0
    %408 = vmatpush1.bf16.msra.mxu0 0
    %409 = vmatprep.subr.bf16.mxu0 0
    %410 = vmatpush1.bf16.msra.mxu0 0
    %411 = vmatprep.subr.bf16.mxu0 0
    %412 = vmatpush1.bf16.msra.mxu0 0
    %413 = vmatprep.subr.bf16.mxu0 0
    %414 = vmatpush1.bf16.msra.mxu0 0
    %415 = vmatprep.subr.bf16.mxu0 0
    %416 = vmatpush1.bf16.msra.mxu0 0
    %417 = vmatprep.subr.bf16.mxu0 0
    %418 = vmatpush1.bf16.msra.mxu0 0
    %419 = vmatprep.subr.bf16.mxu0 0
    %420 = vmatpush1.bf16.msra.mxu0 0
    %421 = vmatprep.subr.bf16.mxu0 0
    %422 = vmatpush1.bf16.msra.mxu0 0
    %423 = vmatprep.subr.bf16.mxu0 0
    %424 = vmatpush1.bf16.msra.mxu0 0
    %425 = vmatprep.subr.bf16.mxu0 0
    %426 = vmatpush1.bf16.msra.mxu0 0
    %427 = vmatprep.subr.bf16.mxu0 0
    %428 = vmatpush1.bf16.msra.mxu0 0
    %429 = vmatprep.subr.bf16.mxu0 0
    %430 = vmatpush1.bf16.msra.mxu0 0
    %431 = vmatprep.mubr.bf16.mxu0 0
    %432 = vmatmul.mubr.bf16.gmra.mrb[0].mxu0 %v304
    %v433 = vpop.f32.mrb[0].mxu0
    %v434 = vadd.f32 %v128, %v433
    %v435 = vpop.f32.mrb[0].mxu0
    %v436 = vpop.f32.mrb[0].mxu0
    %v437 = vadd.f32 %v128, %v436
    %v438 = vpop.f32.mrb[0].mxu0
    %439 = vmatprep.mubr.bf16.mxu0 0
    %440 = vmatmul.mubr.bf16.gmra.mrb[0].mxu0 %v307
    %v441 = vpop.f32.mrb[0].mxu0
    %v442 = vadd.f32 %v128, %v441
    %v443 = vpop.f32.mrb[0].mxu0
    %v444 = vpop.f32.mrb[0].mxu0
    %v445 = vadd.f32 %v128, %v444
    %v446 = vpop.f32.mrb[0].mxu0
    %447 = vmatprep.mubr.bf16.mxu0 0
    %448 = vmatmul.mubr.bf16.gmra.mrb[0].mxu0 %v310
    %v449 = vpop.f32.mrb[0].mxu0
    %v450 = vadd.f32 %v128, %v449
    %v451 = vpop.f32.mrb[0].mxu0
    %v452 = vpop.f32.mrb[0].mxu0
    %v453 = vadd.f32 %v128, %v452
    %v454 = vpop.f32.mrb[0].mxu0
    %455 = vmatprep.mubr.bf16.mxu0 0
    %456 = vmatmul.mubr.bf16.gmra.mrb[0].mxu0 %v313
    %v457 = vpop.f32.mrb[0].mxu0
    %v458 = vadd.f32 %v128, %v457
    %v459 = vpop.f32.mrb[0].mxu0
    %v460 = vpop.f32.mrb[0].mxu0
    %v461 = vadd.f32 %v128, %v460
    %v462 = vpop.f32.mrb[0].mxu0
    %463 = vmatprep.mubr.bf16.mxu0 0
    %464 = vmatmul.mubr.bf16.gmra.mrb[0].mxu0 %v316
    %v465 = vpop.f32.mrb[0].mxu0
    %v466 = vadd.f32 %v128, %v465
    %v467 = vpop.f32.mrb[0].mxu0
    %v468 = vpop.f32.mrb[0].mxu0
    %v469 = vadd.f32 %v128, %v468
    %v470 = vpop.f32.mrb[0].mxu0
    %471 = vmatprep.mubr.bf16.mxu0 0
    %472 = vmatmul.mubr.bf16.gmra.mrb[0].mxu0 %v319
    %v473 = vpop.f32.mrb[0].mxu0
    %v474 = vadd.f32 %v128, %v473
    %v475 = vpop.f32.mrb[0].mxu0
    %v476 = vpop.f32.mrb[0].mxu0
    %v477 = vadd.f32 %v128, %v476
    %v478 = vpop.f32.mrb[0].mxu0
    %479 = vmatprep.mubr.bf16.mxu0 0
    %480 = vmatmul.mubr.bf16.gmra.mrb[0].mxu0 %v322
    %v481 = vpop.f32.mrb[0].mxu0
    %v482 = vadd.f32 %v128, %v481
    %v483 = vpop.f32.mrb[0].mxu0
    %v484 = vpop.f32.mrb[0].mxu0
    %v485 = vadd.f32 %v128, %v484
    %v486 = vpop.f32.mrb[0].mxu0
    %487 = vmatprep.mubr.bf16.mxu0 0
    %488 = vmatmul.mubr.bf16.gmra.mrb[0].mxu0 %v325
    %v489 = vpop.f32.mrb[0].mxu0
    %v490 = vadd.f32 %v128, %v489
    %v491 = vpop.f32.mrb[0].mxu0
    %v492 = vpop.f32.mrb[0].mxu0
    %v493 = vadd.f32 %v128, %v492
    %v494 = vpop.f32.mrb[0].mxu0
    %495 = vmatprep.mubr.bf16.mxu0 0
    %496 = vmatmul.mubr.bf16.gmra.mrb[0].mxu0 %v328
    %v497 = vpop.f32.mrb[0].mxu0
    %v498 = vadd.f32 %v128, %v497
    %v499 = vpop.f32.mrb[0].mxu0
    %v500 = vpop.f32.mrb[0].mxu0
    %v501 = vadd.f32 %v128, %v500
    %v502 = vpop.f32.mrb[0].mxu0
    %503 = vmatprep.mubr.bf16.mxu0 0
    %504 = vmatmul.mubr.bf16.gmra.mrb[0].mxu0 %v331
    %v505 = vpop.f32.mrb[0].mxu0
    %v506 = vadd.f32 %v128, %v505
    %v507 = vpop.f32.mrb[0].mxu0
    %v508 = vpop.f32.mrb[0].mxu0
    %v509 = vadd.f32 %v128, %v508
    %v510 = vpop.f32.mrb[0].mxu0
    %511 = vmatprep.mubr.bf16.mxu0 0
    %512 = vmatmul.mubr.bf16.gmra.mrb[0].mxu0 %v334
    %v513 = vpop.f32.mrb[0].mxu0
    %v514 = vadd.f32 %v128, %v513
    %v515 = vpop.f32.mrb[0].mxu0
    %v516 = vpop.f32.mrb[0].mxu0
    %v517 = vadd.f32 %v128, %v516
    %v518 = vpop.f32.mrb[0].mxu0
    %519 = vmatprep.mubr.bf16.mxu0 0
    %520 = vmatmul.mubr.bf16.gmra.mrb[0].mxu0 %v337
    %v521 = vpop.f32.mrb[0].mxu0
    %v522 = vadd.f32 %v128, %v521
    %v523 = vpop.f32.mrb[0].mxu0
    %v524 = vpop.f32.mrb[0].mxu0
    %v525 = vadd.f32 %v128, %v524
    %v526 = vpop.f32.mrb[0].mxu0
    %527 = vmatprep.mubr.bf16.mxu0 0
    %528 = vmatmul.mubr.bf16.gmra.mrb[0].mxu0 %v340
    %v529 = vpop.f32.mrb[0].mxu0
    %v530 = vadd.f32 %v128, %v529
    %v531 = vpop.f32.mrb[0].mxu0
    %v532 = vpop.f32.mrb[0].mxu0
    %v533 = vadd.f32 %v128, %v532
    %v534 = vpop.f32.mrb[0].mxu0
    %535 = vmatprep.mubr.bf16.mxu0 0
    %536 = vmatmul.mubr.bf16.gmra.mrb[0].mxu0 %v343
    %v537 = vpop.f32.mrb[0].mxu0
    %v538 = vadd.f32 %v128, %v537
    %v539 = vpop.f32.mrb[0].mxu0
    %v540 = vpop.f32.mrb[0].mxu0
    %v541 = vadd.f32 %v128, %v540
    %v542 = vpop.f32.mrb[0].mxu0
    %543 = vmatprep.mubr.bf16.mxu0 0
    %544 = vmatmul.mubr.bf16.gmra.mrb[0].mxu0 %v346
    %v545 = vpop.f32.mrb[0].mxu0
    %v546 = vadd.f32 %v128, %v545
    %v547 = vpop.f32.mrb[0].mxu0
    %v548 = vpop.f32.mrb[0].mxu0
    %v549 = vadd.f32 %v128, %v548
    %v550 = vpop.f32.mrb[0].mxu0
    %551 = vmatprep.mubr.bf16.mxu0 0
    %552 = vmatmul.mubr.bf16.gmra.mrb[0].mxu0 %v349
    %v553 = vpop.f32.mrb[0].mxu0
    %v554 = vadd.f32 %v128, %v553
    %v555 = vpop.f32.mrb[0].mxu0
    %v556 = vpop.f32.mrb[0].mxu0
    %v557 = vadd.f32 %v128, %v556
    %v558 = vpop.f32.mrb[0].mxu0
    %559 = vmatprep.mubr.bf16.mxu0 0
    %560 = vmatmul.mubr.bf16.gmra.mrb[0].mxu0 %v352
    %v561 = vpop.f32.mrb[0].mxu0
    %v562 = vadd.f32 %v128, %v561
    %v563 = vpop.f32.mrb[0].mxu0
    %v564 = vpop.f32.mrb[0].mxu0
    %v565 = vadd.f32 %v128, %v564
    %v566 = vpop.f32.mrb[0].mxu0
    %567 = vmatprep.mubr.bf16.mxu0 0
    %568 = vmatmul.mubr.bf16.gmra.mrb[0].mxu0 %v355
    %v569 = vpop.f32.mrb[0].mxu0
    %v570 = vadd.f32 %v128, %v569
    %v571 = vpop.f32.mrb[0].mxu0
    %v572 = vpop.f32.mrb[0].mxu0
    %v573 = vadd.f32 %v128, %v572
    %v574 = vpop.f32.mrb[0].mxu0
    %575 = vmatprep.mubr.bf16.mxu0 0
    %576 = vmatmul.mubr.bf16.gmra.mrb[0].mxu0 %v358
    %v577 = vpop.f32.mrb[0].mxu0
    %v578 = vadd.f32 %v128, %v577
    %v579 = vpop.f32.mrb[0].mxu0
    %v580 = vpop.f32.mrb[0].mxu0
    %v581 = vadd.f32 %v128, %v580
    %v582 = vpop.f32.mrb[0].mxu0
    %583 = vmatprep.mubr.bf16.mxu0 0
    %584 = vmatmul.mubr.bf16.gmra.mrb[0].mxu0 %v361
    %v585 = vpop.f32.mrb[0].mxu0
    %v586 = vadd.f32 %v128, %v585
    %v587 = vpop.f32.mrb[0].mxu0
    %v588 = vpop.f32.mrb[0].mxu0
    %v589 = vadd.f32 %v128, %v588
    %v590 = vpop.f32.mrb[0].mxu0
    %591 = vmatprep.mubr.bf16.mxu0 0
    %592 = vmatmul.mubr.bf16.gmra.mrb[0].mxu0 %v364
    %v593 = vpop.f32.mrb[0].mxu0
    %v594 = vadd.f32 %v128, %v593
    %v595 = vpop.f32.mrb[0].mxu0
    %v596 = vpop.f32.mrb[0].mxu0
    %v597 = vadd.f32 %v128, %v596
    %v598 = vpop.f32.mrb[0].mxu0
    %599 = vmatprep.mubr.bf16.mxu0 0
    %600 = vmatmul.mubr.bf16.gmra.mrb[0].mxu0 %v367
    %v601 = vpop.f32.mrb[0].mxu0
    %v602 = vadd.f32 %v128, %v601
    %v603 = vpop.f32.mrb[0].mxu0
    %v604 = vpop.f32.mrb[0].mxu0
    %v605 = vadd.f32 %v128, %v604
    %v606 = vpop.f32.mrb[0].mxu0
    %607 = vmatprep.mubr.bf16.mxu0 0
    %608 = vmatmul.mubr.bf16.gmra.mrb[0].mxu0 %v370
    %v609 = vpop.f32.mrb[0].mxu0
    %v610 = vadd.f32 %v128, %v609
    %v611 = vpop.f32.mrb[0].mxu0
    %v612 = vpop.f32.mrb[0].mxu0
    %v613 = vadd.f32 %v128, %v612
    %v614 = vpop.f32.mrb[0].mxu0
    %615 = vmatprep.mubr.bf16.mxu0 0
    %616 = vmatmul.mubr.bf16.gmra.mrb[0].mxu0 %v373
    %v617 = vpop.f32.mrb[0].mxu0
    %v618 = vadd.f32 %v128, %v617
    %v619 = vpop.f32.mrb[0].mxu0
    %v620 = vpop.f32.mrb[0].mxu0
    %v621 = vadd.f32 %v128, %v620
    %v622 = vpop.f32.mrb[0].mxu0
    %623 = vmatprep.mubr.bf16.mxu0 0
    %624 = vmatmul.mubr.bf16.gmra.mrb[0].mxu0 %v376
    %v625 = vpop.f32.mrb[0].mxu0
    %v626 = vadd.f32 %v128, %v625
    %v627 = vpop.f32.mrb[0].mxu0
    %v628 = vpop.f32.mrb[0].mxu0
    %v629 = vadd.f32 %v128, %v628
    %v630 = vpop.f32.mrb[0].mxu0
    %631 = vmatprep.mubr.bf16.mxu0 0
    %632 = vmatmul.mubr.bf16.gmra.mrb[0].mxu0 %v379
    %v633 = vpop.f32.mrb[0].mxu0
    %v634 = vadd.f32 %v128, %v633
    %v635 = vpop.f32.mrb[0].mxu0
    %v636 = vpop.f32.mrb[0].mxu0
    %v637 = vadd.f32 %v128, %v636
    %v638 = vpop.f32.mrb[0].mxu0
    %639 = vmatprep.mubr.bf16.mxu0 0
    %640 = vmatmul.mubr.bf16.gmra.mrb[0].mxu0 %v382
    %v641 = vpop.f32.mrb[0].mxu0
    %v642 = vadd.f32 %v128, %v641
    %v643 = vpop.f32.mrb[0].mxu0
    %v644 = vpop.f32.mrb[0].mxu0
    %v645 = vadd.f32 %v128, %v644
    %v646 = vpop.f32.mrb[0].mxu0
    %647 = vmatprep.mubr.bf16.mxu0 0
    %648 = vmatmul.mubr.bf16.gmra.mrb[0].mxu0 %v385
    %v649 = vpop.f32.mrb[0].mxu0
    %v650 = vadd.f32 %v128, %v649
    %v651 = vpop.f32.mrb[0].mxu0
    %v652 = vpop.f32.mrb[0].mxu0
    %v653 = vadd.f32 %v128, %v652
    %v654 = vpop.f32.mrb[0].mxu0
    %655 = vmatprep.mubr.bf16.mxu0 0
    %656 = vmatmul.mubr.bf16.gmra.mrb[0].mxu0 %v388
    %v657 = vpop.f32.mrb[0].mxu0
    %v658 = vadd.f32 %v128, %v657
    %v659 = vpop.f32.mrb[0].mxu0
    %v660 = vpop.f32.mrb[0].mxu0
    %v661 = vadd.f32 %v128, %v660
    %v662 = vpop.f32.mrb[0].mxu0
    %663 = vmatprep.mubr.bf16.mxu0 0
    %664 = vmatmul.mubr.bf16.gmra.mrb[0].mxu0 %v391
    %v665 = vpop.f32.mrb[0].mxu0
    %v666 = vadd.f32 %v128, %v665
    %v667 = vpop.f32.mrb[0].mxu0
    %v668 = vpop.f32.mrb[0].mxu0
    %v669 = vadd.f32 %v128, %v668
    %v670 = vpop.f32.mrb[0].mxu0
    %671 = vmatprep.mubr.bf16.mxu0 0
    %672 = vmatmul.mubr.bf16.gmra.mrb[0].mxu0 %v394
    %v673 = vpop.f32.mrb[0].mxu0
    %v674 = vadd.f32 %v128, %v673
    %v675 = vpop.f32.mrb[0].mxu0
    %v676 = vpop.f32.mrb[0].mxu0
    %v677 = vadd.f32 %v128, %v676
    %v678 = vpop.f32.mrb[0].mxu0
    %679 = vmatprep.mubr.bf16.mxu0 0
    %680 = vmatmul.mubr.bf16.gmra.mrb[0].mxu0 %v397
    %v681 = vpop.f32.mrb[0].mxu0
    %v682 = vadd.f32 %v128, %v681
    %v683 = vpop.f32.mrb[0].mxu0
    %v684 = vpop.f32.mrb[0].mxu0
    %v685 = vadd.f32 %v128, %v684
    %v686 = vpop.f32.mrb[0].mxu0
    %687 = vdwg.mxu0
    %v688 = vpack.c.bf16 %v437, %v434
    %v689 = vpack.c.bf16 %v445, %v442
    %v690 = vpack.c.bf16 %v453, %v450
    %v691 = vpack.c.bf16 %v461, %v458
    %v692 = vpack.c.bf16 %v469, %v466
    %v693 = vpack.c.bf16 %v477, %v474
    %v694 = vpack.c.bf16 %v485, %v482
    %v695 = vpack.c.bf16 %v493, %v490
    %v696 = vpack.c.bf16 %v501, %v498
    %v697 = vpack.c.bf16 %v509, %v506
    %v698 = vpack.c.bf16 %v517, %v514
    %v699 = vpack.c.bf16 %v525, %v522
    %v700 = vpack.c.bf16 %v533, %v530
    %v701 = vpack.c.bf16 %v541, %v538
    %v702 = vpack.c.bf16 %v549, %v546
    %v703 = vpack.c.bf16 %v557, %v554
    %v704 = vpack.c.bf16 %v565, %v562
    %v705 = vpack.c.bf16 %v573, %v570
    %v706 = vpack.c.bf16 %v581, %v578
    %v707 = vpack.c.bf16 %v589, %v586
    %v708 = vpack.c.bf16 %v597, %v594
    %v709 = vpack.c.bf16 %v605, %v602
    %v710 = vpack.c.bf16 %v613, %v610
    %v711 = vpack.c.bf16 %v621, %v618
    %v712 = vpack.c.bf16 %v629, %v626
    %v713 = vpack.c.bf16 %v637, %v634
    %v714 = vpack.c.bf16 %v645, %v642
    %v715 = vpack.c.bf16 %v653, %v650
    %v716 = vpack.c.bf16 %v661, %v658
    %v717 = vpack.c.bf16 %v669, %v666
    %v718 = vpack.c.bf16 %v677, %v674
    %v719 = vpack.c.bf16 %v685, %v682
    %v752 = vunpack.c.l.b16 %v688
    %v753 = vunpack.c.h.b16 %v688
    %v754 = vunpack.c.l.b16 %v689
    %v755 = vunpack.c.h.b16 %v689
    %v756 = vunpack.c.l.b16 %v690
    %v757 = vunpack.c.h.b16 %v690
    %v758 = vunpack.c.l.b16 %v691
    %v759 = vunpack.c.h.b16 %v691
    %v760 = vunpack.c.l.b16 %v692
    %v761 = vunpack.c.h.b16 %v692
    %v762 = vunpack.c.l.b16 %v693
    %v763 = vunpack.c.h.b16 %v693
    %v764 = vunpack.c.l.b16 %v694
    %v765 = vunpack.c.h.b16 %v694
    %v766 = vunpack.c.l.b16 %v695
    %v767 = vunpack.c.h.b16 %v695
    %v768 = vunpack.c.l.b16 %v696
    %v769 = vunpack.c.h.b16 %v696
    %v770 = vunpack.c.l.b16 %v697
    %v771 = vunpack.c.h.b16 %v697
    %v772 = vunpack.c.l.b16 %v698
    %v773 = vunpack.c.h.b16 %v698
    %v774 = vunpack.c.l.b16 %v699
    %v775 = vunpack.c.h.b16 %v699
    %v776 = vunpack.c.l.b16 %v700
    %v777 = vunpack.c.h.b16 %v700
    %v778 = vunpack.c.l.b16 %v701
    %v779 = vunpack.c.h.b16 %v701
    %v780 = vunpack.c.l.b16 %v702
    %v781 = vunpack.c.h.b16 %v702
    %v782 = vunpack.c.l.b16 %v703
    %v783 = vunpack.c.h.b16 %v703
    %v784 = vunpack.c.l.b16 %v704
    %v785 = vunpack.c.h.b16 %v704
    %v786 = vunpack.c.l.b16 %v705
    %v787 = vunpack.c.h.b16 %v705
    %v788 = vunpack.c.l.b16 %v706
    %v789 = vunpack.c.h.b16 %v706
    %v790 = vunpack.c.l.b16 %v707
    %v791 = vunpack.c.h.b16 %v707
    %v792 = vunpack.c.l.b16 %v708
    %v793 = vunpack.c.h.b16 %v708
    %v794 = vunpack.c.l.b16 %v709
    %v795 = vunpack.c.h.b16 %v709
    %v796 = vunpack.c.l.b16 %v710
    %v797 = vunpack.c.h.b16 %v710
    %v798 = vunpack.c.l.b16 %v711
    %v799 = vunpack.c.h.b16 %v711
    %v800 = vunpack.c.l.b16 %v712
    %v801 = vunpack.c.h.b16 %v712
    %v802 = vunpack.c.l.b16 %v713
    %v803 = vunpack.c.h.b16 %v713
    %v804 = vunpack.c.l.b16 %v714
    %v805 = vunpack.c.h.b16 %v714
    %v806 = vunpack.c.l.b16 %v715
    %v807 = vunpack.c.h.b16 %v715
    %v808 = vunpack.c.l.b16 %v716
    %v809 = vunpack.c.h.b16 %v716
    %v810 = vunpack.c.l.b16 %v717
    %v811 = vunpack.c.h.b16 %v717
    %v812 = vunpack.c.l.b16 %v718
    %v813 = vunpack.c.h.b16 %v718
    %v814 = vunpack.c.l.b16 %v719
    %v815 = vunpack.c.h.b16 %v719
    %v816 = vpack.c.b16 %v752, %v752
    %v817 = vpack.c.b16 %v753, %v753
    %v818 = vpack.c.b16 %v754, %v754
    %v819 = vpack.c.b16 %v755, %v755
    %v820 = vpack.c.b16 %v756, %v756
    %v821 = vpack.c.b16 %v757, %v757
    %v822 = vpack.c.b16 %v758, %v758
    %v823 = vpack.c.b16 %v759, %v759
    %v824 = vpack.c.b16 %v760, %v760
    %v825 = vpack.c.b16 %v761, %v761
    %v826 = vpack.c.b16 %v762, %v762
    %v827 = vpack.c.b16 %v763, %v763
    %v828 = vpack.c.b16 %v764, %v764
    %v829 = vpack.c.b16 %v765, %v765
    %v830 = vpack.c.b16 %v766, %v766
    %v831 = vpack.c.b16 %v767, %v767
    %v832 = vpack.c.b16 %v768, %v768
    %v833 = vpack.c.b16 %v769, %v769
    %v834 = vpack.c.b16 %v770, %v770
    %v835 = vpack.c.b16 %v771, %v771
    %v836 = vpack.c.b16 %v772, %v772
    %v837 = vpack.c.b16 %v773, %v773
    %v838 = vpack.c.b16 %v774, %v774
    %v839 = vpack.c.b16 %v775, %v775
    %v840 = vpack.c.b16 %v776, %v776
    %v841 = vpack.c.b16 %v777, %v777
    %v842 = vpack.c.b16 %v778, %v778
    %v843 = vpack.c.b16 %v779, %v779
    %v844 = vpack.c.b16 %v780, %v780
    %v845 = vpack.c.b16 %v781, %v781
    %v846 = vpack.c.b16 %v782, %v782
    %v847 = vpack.c.b16 %v783, %v783
    %v848 = vpack.c.b16 %v784, %v784
    %v849 = vpack.c.b16 %v785, %v785
    %v850 = vpack.c.b16 %v786, %v786
    %v851 = vpack.c.b16 %v787, %v787
    %v852 = vpack.c.b16 %v788, %v788
    %v853 = vpack.c.b16 %v789, %v789
    %v854 = vpack.c.b16 %v790, %v790
    %v855 = vpack.c.b16 %v791, %v791
    %v856 = vpack.c.b16 %v792, %v792
    %v857 = vpack.c.b16 %v793, %v793
    %v858 = vpack.c.b16 %v794, %v794
    %v859 = vpack.c.b16 %v795, %v795
    %v860 = vpack.c.b16 %v796, %v796
    %v861 = vpack.c.b16 %v797, %v797
    %v862 = vpack.c.b16 %v798, %v798
    %v863 = vpack.c.b16 %v799, %v799
    %v864 = vpack.c.b16 %v800, %v800
    %v865 = vpack.c.b16 %v801, %v801
    %v866 = vpack.c.b16 %v802, %v802
    %v867 = vpack.c.b16 %v803, %v803
    %v868 = vpack.c.b16 %v804, %v804
    %v869 = vpack.c.b16 %v805, %v805
    %v870 = vpack.c.b16 %v806, %v806
    %v871 = vpack.c.b16 %v807, %v807
    %v872 = vpack.c.b16 %v808, %v808
    %v873 = vpack.c.b16 %v809, %v809
    %v874 = vpack.c.b16 %v810, %v810
    %v875 = vpack.c.b16 %v811, %v811
    %v876 = vpack.c.b16 %v812, %v812
    %v877 = vpack.c.b16 %v813, %v813
    %v878 = vpack.c.b16 %v814, %v814
    %v879 = vpack.c.b16 %v815, %v815
    %944 = vst [vmem:[#allocation8] sm:$0xf] %v816
    %945 = vst [vmem:[#allocation8 + $0x4] sm:$0xf] %v817
    %946 = vst [vmem:[#allocation8 + $0x8] sm:$0xf] %v818
    %947 = vst [vmem:[#allocation8 + $0xc] sm:$0xf] %v819
    %948 = vst [vmem:[#allocation8 + $0x10] sm:$0xf] %v820
    %949 = vst [vmem:[#allocation8 + $0x14] sm:$0xf] %v821
    %950 = vst [vmem:[#allocation8 + $0x18] sm:$0xf] %v822
    %951 = vst [vmem:[#allocation8 + $0x1c] sm:$0xf] %v823
    %952 = vst [vmem:[#allocation8 + $0x20] sm:$0xf] %v824
    %953 = vst [vmem:[#allocation8 + $0x24] sm:$0xf] %v825
    %954 = vst [vmem:[#allocation8 + $0x28] sm:$0xf] %v826
    %955 = vst [vmem:[#allocation8 + $0x2c] sm:$0xf] %v827
    %956 = vst [vmem:[#allocation8 + $0x30] sm:$0xf] %v828
    %957 = vst [vmem:[#allocation8 + $0x34] sm:$0xf] %v829
    %958 = vst [vmem:[#allocation8 + $0x38] sm:$0xf] %v830
    %959 = vst [vmem:[#allocation8 + $0x3c] sm:$0xf] %v831
    %960 = vst [vmem:[#allocation8 + $0x40] sm:$0xf] %v832
    %961 = vst [vmem:[#allocation8 + $0x44] sm:$0xf] %v833
    %962 = vst [vmem:[#allocation8 + $0x48] sm:$0xf] %v834
    %963 = vst [vmem:[#allocation8 + $0x4c] sm:$0xf] %v835
    %964 = vst [vmem:[#allocation8 + $0x50] sm:$0xf] %v836
    %965 = vst [vmem:[#allocation8 + $0x54] sm:$0xf] %v837
    %966 = vst [vmem:[#allocation8 + $0x58] sm:$0xf] %v838
    %967 = vst [vmem:[#allocation8 + $0x5c] sm:$0xf] %v839
    %968 = vst [vmem:[#allocation8 + $0x60] sm:$0xf] %v840
    %969 = vst [vmem:[#allocation8 + $0x64] sm:$0xf] %v841
    %970 = vst [vmem:[#allocation8 + $0x68] sm:$0xf] %v842
    %971 = vst [vmem:[#allocation8 + $0x6c] sm:$0xf] %v843
    %972 = vst [vmem:[#allocation8 + $0x70] sm:$0xf] %v844
    %973 = vst [vmem:[#allocation8 + $0x74] sm:$0xf] %v845
    %974 = vst [vmem:[#allocation8 + $0x78] sm:$0xf] %v846
    %975 = vst [vmem:[#allocation8 + $0x7c] sm:$0xf] %v847
    %976 = vst [vmem:[#allocation8 + $0x80] sm:$0xf] %v848
    %977 = vst [vmem:[#allocation8 + $0x84] sm:$0xf] %v849
    %978 = vst [vmem:[#allocation8 + $0x88] sm:$0xf] %v850
    %979 = vst [vmem:[#allocation8 + $0x8c] sm:$0xf] %v851
    %980 = vst [vmem:[#allocation8 + $0x90] sm:$0xf] %v852
    %981 = vst [vmem:[#allocation8 + $0x94] sm:$0xf] %v853
    %982 = vst [vmem:[#allocation8 + $0x98] sm:$0xf] %v854
    %983 = vst [vmem:[#allocation8 + $0x9c] sm:$0xf] %v855
    %984 = vst [vmem:[#allocation8 + $0xa0] sm:$0xf] %v856
    %985 = vst [vmem:[#allocation8 + $0xa4] sm:$0xf] %v857
    %986 = vst [vmem:[#allocation8 + $0xa8] sm:$0xf] %v858
    %987 = vst [vmem:[#allocation8 + $0xac] sm:$0xf] %v859
    %988 = vst [vmem:[#allocation8 + $0xb0] sm:$0xf] %v860
    %989 = vst [vmem:[#allocation8 + $0xb4] sm:$0xf] %v861
    %990 = vst [vmem:[#allocation8 + $0xb8] sm:$0xf] %v862
    %991 = vst [vmem:[#allocation8 + $0xbc] sm:$0xf] %v863
    %992 = vst [vmem:[#allocation8 + $0xc0] sm:$0xf] %v864
    %993 = vst [vmem:[#allocation8 + $0xc4] sm:$0xf] %v865
    %994 = vst [vmem:[#allocation8 + $0xc8] sm:$0xf] %v866
    %995 = vst [vmem:[#allocation8 + $0xcc] sm:$0xf] %v867
    %996 = vst [vmem:[#allocation8 + $0xd0] sm:$0xf] %v868
    %997 = vst [vmem:[#allocation8 + $0xd4] sm:$0xf] %v869
    %998 = vst [vmem:[#allocation8 + $0xd8] sm:$0xf] %v870
    %999 = vst [vmem:[#allocation8 + $0xdc] sm:$0xf] %v871
    %1000 = vst [vmem:[#allocation8 + $0xe0] sm:$0xf] %v872
    %1001 = vst [vmem:[#allocation8 + $0xe4] sm:$0xf] %v873
    %1002 = vst [vmem:[#allocation8 + $0xe8] sm:$0xf] %v874
    %1003 = vst [vmem:[#allocation8 + $0xec] sm:$0xf] %v875
    %1004 = vst [vmem:[#allocation8 + $0xf0] sm:$0xf] %v876
    %1005 = vst [vmem:[#allocation8 + $0xf4] sm:$0xf] %v877
    %1006 = vst [vmem:[#allocation8 + $0xf8] sm:$0xf] %v878
    %1007 = vst [vmem:[#allocation8 + $0xfc] sm:$0xf] %v879
    // Predicated region
    $region26: #{mixffn_forward.2} parent=1 // pred_check
      _
    $region27: #{mixffn_forward.2} parent=1 // pred_check_branch
      %1009 = sbr.rel (0) target = $region29
    $region28: #{mixffn_forward.2} parent=1 // pred_region
      %s1011 = ssub.s32 4096, 4096
      %1012 = vsyncadd [#allocation4], %s1011
      %s1013 = sshll.u32 [#allocation8], 4
      %s1014 = int_to_ptr.vmem [resolvable:$true] %s1013
      %1019 = dma.vmem_to_hbm [thread:$0]  %s1014, 4096, %s3, [#allocation4], 64, 64, 4
    $region29: #{mixffn_forward.2} parent=1 // pred_fallthru
      _
    // Predicated region
    $region30: #{mixffn_forward.2} parent=1 // pred_check
      _
    $region31: #{mixffn_forward.2} parent=1 // pred_check_branch
      %1021 = sbr.rel (0) target = $region33
    $region32: #{mixffn_forward.2} parent=1 // pred_region
      %1022 = dma.done [#allocation4], 4096
    $region33: #{mixffn_forward.2} parent=1 // pred_fallthru
      _
    %1023 = vsyncpa [#allocation3], 1
    %1024 = vsyncpa [#allocation6], 1
    %1025 = vsyncpa [#allocation4], 1

// kernel: mixffn_forward.3
$region0: #{mixffn_forward.3}
  #allocation0 [shape = 'u32[]', space=smem, size = 0x4, offset = 0x4, fixed_abs, tag = 'smem constant byte address 0x4 - core index']
  #allocation1 [shape = 'u32[144,128]{1,0:T(1,128)}', space=vmem, size = 0x12000, scoped, tag = 'internal scratch']
  %s0 = inlined_call_operand.hbm [shape: bf16[2,16,16,128], index: 0, kind: input, shape index: {}, may-alias: {0,1,2}]
  %s1 = inlined_call_operand.hbm [shape: bf16[2,16,16,128], index: 1, kind: input, shape index: {}, may-alias: {0,1,2}]
  %s2 = inlined_call_operand.hbm [shape: bf16[2,16,16,128], index: 2, kind: input, shape index: {}, may-alias: {0,1,2}]
  %s3 = inlined_call_operand.hbm [shape: f32[3,3,128], index: 3, kind: input, shape index: {}]
  %s4 = inlined_call_operand.hbm [shape: f32[1,1,128], index: 4, kind: input, shape index: {}]
  %s5 = inlined_call_operand.hbm [shape: bf16[128,32], index: 5, kind: input, shape index: {}]
  %s6 = inlined_call_operand.hbm [shape: f32[1,32], index: 6, kind: input, shape index: {}]
  %s7 = inlined_call_operand.hbm [shape: f32[2,16,16,32], index: 7, kind: output, shape index: {}]
  %s8 = sld [smem:[#allocation0]]
  $region89: #{mixffn_forward.3} parent=0
    _
  %s10 = ssub.s32 1, %s8
  %s11 = scalar_select 0, %s10, %s8
  $region1: #{mixffn_forward.3} parent=0
    #allocation2 [shape = 'u8[65536]{0}', space=vmem, size = 0x10000, scoped, tag = 'input window, operand 0']
    #allocation3 [shape = 's32[2]{0}', space=sflag, size = 0x8, scoped, tag = 'scoped memory for mixffn_forward.3']
    #allocation4 [shape = 's32[2]{0}', space=sflag, size = 0x8, scoped, tag = 'scoped memory for mixffn_forward.3']
    #allocation5 [shape = 'u8[8192]{0}', space=vmem, size = 0x2000, scoped, tag = 'input window, operand 1']
    #allocation6 [shape = 's32[2]{0}', space=sflag, size = 0x8, scoped, tag = 'scoped memory for mixffn_forward.3']
    #allocation7 [shape = 'u8[8192]{0}', space=vmem, size = 0x2000, scoped, tag = 'input window, operand 2']
    #allocation8 [shape = 'u8[6144]{0}', space=vmem, size = 0x1800, scoped, tag = 'input window, operand 3, single buffered']
    #allocation9 [shape = 's32[1]{0}', space=sflag, size = 0x4, scoped, tag = 'scoped memory for mixffn_forward.3']
    #allocation10 [shape = 'u8[512]{0}', space=vmem, size = 0x400, scoped, tag = 'input window, operand 4, single buffered']
    #allocation11 [shape = 'u8[32768]{0}', space=vmem, size = 0x8000, scoped, tag = 'input window, operand 5, single buffered']
    #allocation12 [shape = 's32[1]{0}', space=sflag, size = 0x4, scoped, tag = 'scoped memory for mixffn_forward.3']
    #allocation13 [shape = 'u8[512]{0}', space=vmem, size = 0x400, scoped, tag = 'input window, operand 6, single buffered']
    #allocation14 [shape = 'u8[131072]{0}', space=vmem, size = 0x20000, scoped, tag = 'output window, operand 0']
    %12 = vsyncpa [#allocation3], 0
    %s13 = scalar_lea.sflag [#allocation3], 1
    %14 = vsyncpa %s13, 0
    %15 = vsyncpa [#allocation6], 0
    %s16 = scalar_lea.sflag [#allocation6], 1
    %17 = vsyncpa %s16, 0
    %18 = vsyncpa [#allocation9], 0
    %19 = vsyncpa [#allocation12], 0
    %20 = vsyncpa [#allocation4], 0
    %s21 = scalar_lea.sflag [#allocation4], 1
    %22 = vsyncpa %s21, 0
    loop: start=0, step=1, limit=6
    $region2: #{mixffn_forward.3} parent=1 // loop_pre_header
      _
    $region3: #{mixffn_forward.3} parent=1 // loop_header
      %s24 = sphi 0, %s28
      %p25 = scmp.ge.s32.totalorder %s24, 6
      %s31 = sphi 0, %s43
      %s32 = sphi 0, %s39
      %s33 = sphi 0, %s31
      %s34 = sphi 0, %s32
      %s35 = sphi 0, %s33
      %s36 = sphi 0, %s34
      %s48 = sphi 0, %s50
      %s51 = sphi 0, %s48
      %s52 = sphi 0, %s51
      %s68 = sphi 0, %s52
      %s84 = sphi 0, %s86
      %s87 = sphi 0, %s84
      %s88 = sphi 0, %s87
      %s104 = sphi 0, %s88
      %s120 = sphi 0, %s122
      %s123 = sphi 0, %s120
      %s124 = sphi 0, %s123
      %s140 = sphi 0, %s124
      %s144 = sphi 0, %s144
      %s146 = sphi 0, %s144
      %s147 = sphi 0, %s146
      %s161 = sphi 0, %s147
      %s165 = sphi 0, %s165
      %s167 = sphi 0, %s165
      %s168 = sphi 0, %s167
      %s182 = sphi 0, %s168
      %s186 = sphi 0, %s186
      %s188 = sphi 0, %s186
      %s189 = sphi 0, %s188
      %s203 = sphi 0, %s189
      %s207 = sphi 0, %s207
      %s209 = sphi 0, %s207
      %s210 = sphi 0, %s209
      %s224 = sphi 0, %s210
      %s232 = sphi 0, %s234
      %s235 = sphi 0, %s232
      %s236 = sphi 0, %s235
      %s252 = sphi 0, %s236
    $region4: #{mixffn_forward.3} parent=1 // loop_header_branch
      %27 = sbr.rel (%p25) target = $region8
    $region5: #{mixffn_forward.3} parent=1 // loop_body
      %s29 = ssub.s32 %s24, 1
      %s30 = ssub.s32 %s24, 2
      %s37 = sadd.s32 1, %s32
      %p38 = scmp.ge.s32.totalorder %s37, 2
      %s39 = scalar_select %p38, 0, %s37
      %s40 = sadd.s32 1, %s31
      %s41 = scalar_select %p38, %s40, %s31
      %p42 = scmp.ge.s32.totalorder %s41, 2
      %s43 = scalar_select %p42, 0, %s41
      %s44 = ssub.s32 %s31, %s43
      %s45 = ssub.s32 %s32, %s39
      %s46 = sor.u32 %s44, %s45
      %p47 = scmp.eq.s32.totalorder %s46, 0
      %s49 = sadd.s32 %s48, 1
      %s50 = scalar_select %p47, %s48, %s49
      %p53 = pneg %p47
      %p54 = scmp.eq.s32.totalorder %s24, 3
      %p55 = por %p53, %p54
      %p56 = scmp.ne.s32.totalorder %s48, %s51
      %p57 = scmp.eq.s32.totalorder %s24, 0
      %p58 = por %p56, %p57
      %p59 = scmp.ne.s32.totalorder %s48, %s51
      %p60 = scmp.eq.s32.totalorder %s29, 3
      %p61 = por %p59, %p60
      %p62 = scmp.ne.s32.totalorder %s51, %s52
      %p63 = scmp.eq.s32.totalorder %s29, 0
      %p64 = por %p62, %p63
      %p65 = scmp.ne.s32.totalorder %s51, %s52
      %p66 = scmp.eq.s32.totalorder %s30, 3
      %p67 = por %p65, %p66
      %p69 = scmp.ne.s32.totalorder %s52, %s68
      %p70 = scmp.eq.s32.totalorder %s30, 0
      %p71 = por %p69, %p70
      %s72 = smul.u32 %s32, 8
      %s73 = ssub.s32 %s72, 1
      %p74 = scmp.gt.s32.totalorder %s73, 0
      %s75 = scalar_select %p74, %s73, 0
      %s76 = smul.u32 %s39, 8
      %s77 = ssub.s32 %s76, 1
      %p78 = scmp.gt.s32.totalorder %s77, 0
      %s79 = scalar_select %p78, %s77, 0
      %s80 = ssub.s32 %s31, %s43
      %s81 = ssub.s32 %s75, %s79
      %s82 = sor.u32 %s80, %s81
      %p83 = scmp.eq.s32.totalorder %s82, 0
      %s85 = sadd.s32 %s84, 1
      %s86 = scalar_select %p83, %s84, %s85
      %p89 = pneg %p83
      %p90 = scmp.eq.s32.totalorder %s24, 3
      %p91 = por %p89, %p90
      %p92 = scmp.ne.s32.totalorder %s84, %s87
      %p93 = scmp.eq.s32.totalorder %s24, 0
      %p94 = por %p92, %p93
      %p95 = scmp.ne.s32.totalorder %s84, %s87
      %p96 = scmp.eq.s32.totalorder %s29, 3
      %p97 = por %p95, %p96
      %p98 = scmp.ne.s32.totalorder %s87, %s88
      %p99 = scmp.eq.s32.totalorder %s29, 0
      %p100 = por %p98, %p99
      %p101 = scmp.ne.s32.totalorder %s87, %s88
      %p102 = scmp.eq.s32.totalorder %s30, 3
      %p103 = por %p101, %p102
      %p105 = scmp.ne.s32.totalorder %s88, %s104
      %p106 = scmp.eq.s32.totalorder %s30, 0
      %p107 = por %p105, %p106
      %s108 = sadd.s32 %s32, 1
      %s109 = smul.u32 %s108, 8
      %p110 = scmp.lt.s32.totalorder %s109, 15
      %s111 = scalar_select %p110, %s109, 15
      %s112 = sadd.s32 %s39, 1
      %s113 = smul.u32 %s112, 8
      %p114 = scmp.lt.s32.totalorder %s113, 15
      %s115 = scalar_select %p114, %s113, 15
      %s116 = ssub.s32 %s31, %s43
      %s117 = ssub.s32 %s111, %s115
      %s118 = sor.u32 %s116, %s117
      %p119 = scmp.eq.s32.totalorder %s118, 0
      %s121 = sadd.s32 %s120, 1
      %s122 = scalar_select %p119, %s120, %s121
      %p125 = pneg %p119
      %p126 = scmp.eq.s32.totalorder %s24, 3
      %p127 = por %p125, %p126
      %p128 = scmp.ne.s32.totalorder %s120, %s123
      %p129 = scmp.eq.s32.totalorder %s24, 0
      %p130 = por %p128, %p129
      %p131 = scmp.ne.s32.totalorder %s120, %s123
      %p132 = scmp.eq.s32.totalorder %s29, 3
      %p133 = por %p131, %p132
      %p134 = scmp.ne.s32.totalorder %s123, %s124
      %p135 = scmp.eq.s32.totalorder %s29, 0
      %p136 = por %p134, %p135
      %p137 = scmp.ne.s32.totalorder %s123, %s124
      %p138 = scmp.eq.s32.totalorder %s30, 3
      %p139 = por %p137, %p138
      %p141 = scmp.ne.s32.totalorder %s124, %s140
      %p142 = scmp.eq.s32.totalorder %s30, 0
      %p143 = por %p141, %p142
      %s145 = sadd.s32 %s144, 1
      %p148 = scmp.eq.s32.totalorder %s24, 3
      %p149 = scmp.ne.s32.totalorder %s144, %s146
      %p150 = scmp.eq.s32.totalorder %s24, 0
      %p151 = por %p149, %p150
      %p152 = scmp.ne.s32.totalorder %s144, %s146
      %p153 = scmp.eq.s32.totalorder %s29, 3
      %p154 = por %p152, %p153
      %p155 = scmp.ne.s32.totalorder %s146, %s147
      %p156 = scmp.eq.s32.totalorder %s29, 0
      %p157 = por %p155, %p156
      %p158 = scmp.ne.s32.totalorder %s146, %s147
      %p159 = scmp.eq.s32.totalorder %s30, 3
      %p160 = por %p158, %p159
      %p162 = scmp.ne.s32.totalorder %s147, %s161
      %p163 = scmp.eq.s32.totalorder %s30, 0
      %p164 = por %p162, %p163
      %s166 = sadd.s32 %s165, 1
      %p169 = scmp.eq.s32.totalorder %s24, 3
      %p170 = scmp.ne.s32.totalorder %s165, %s167
      %p171 = scmp.eq.s32.totalorder %s24, 0
      %p172 = por %p170, %p171
      %p173 = scmp.ne.s32.totalorder %s165, %s167
      %p174 = scmp.eq.s32.totalorder %s29, 3
      %p175 = por %p173, %p174
      %p176 = scmp.ne.s32.totalorder %s167, %s168
      %p177 = scmp.eq.s32.totalorder %s29, 0
      %p178 = por %p176, %p177
      %p179 = scmp.ne.s32.totalorder %s167, %s168
      %p180 = scmp.eq.s32.totalorder %s30, 3
      %p181 = por %p179, %p180
      %p183 = scmp.ne.s32.totalorder %s168, %s182
      %p184 = scmp.eq.s32.totalorder %s30, 0
      %p185 = por %p183, %p184
      %s187 = sadd.s32 %s186, 1
      %p190 = scmp.eq.s32.totalorder %s24, 3
      %p191 = scmp.ne.s32.totalorder %s186, %s188
      %p192 = scmp.eq.s32.totalorder %s24, 0
      %p193 = por %p191, %p192
      %p194 = scmp.ne.s32.totalorder %s186, %s188
      %p195 = scmp.eq.s32.totalorder %s29, 3
      %p196 = por %p194, %p195
      %p197 = scmp.ne.s32.totalorder %s188, %s189
      %p198 = scmp.eq.s32.totalorder %s29, 0
      %p199 = por %p197, %p198
      %p200 = scmp.ne.s32.totalorder %s188, %s189
      %p201 = scmp.eq.s32.totalorder %s30, 3
      %p202 = por %p200, %p201
      %p204 = scmp.ne.s32.totalorder %s189, %s203
      %p205 = scmp.eq.s32.totalorder %s30, 0
      %p206 = por %p204, %p205
      %s208 = sadd.s32 %s207, 1
      %p211 = scmp.eq.s32.totalorder %s24, 3
      %p212 = scmp.ne.s32.totalorder %s207, %s209
      %p213 = scmp.eq.s32.totalorder %s24, 0
      %p214 = por %p212, %p213
      %p215 = scmp.ne.s32.totalorder %s207, %s209
      %p216 = scmp.eq.s32.totalorder %s29, 3
      %p217 = por %p215, %p216
      %p218 = scmp.ne.s32.totalorder %s209, %s210
      %p219 = scmp.eq.s32.totalorder %s29, 0
      %p220 = por %p218, %p219
      %p221 = scmp.ne.s32.totalorder %s209, %s210
      %p222 = scmp.eq.s32.totalorder %s30, 3
      %p223 = por %p221, %p222
      %p225 = scmp.ne.s32.totalorder %s210, %s224
      %p226 = scmp.eq.s32.totalorder %s30, 0
      %p227 = por %p225, %p226
      %s228 = ssub.s32 %s31, %s43
      %s229 = ssub.s32 %s32, %s39
      %s230 = sor.u32 %s228, %s229
      %p231 = scmp.eq.s32.totalorder %s230, 0
      %s233 = sadd.s32 %s232, 1
      %s234 = scalar_select %p231, %s232, %s233
      %p237 = pneg %p231
      %p238 = scmp.eq.s32.totalorder %s24, 3
      %p239 = por %p237, %p238
      %p240 = scmp.ne.s32.totalorder %s232, %s235
      %p241 = scmp.eq.s32.totalorder %s24, 0
      %p242 = por %p240, %p241
      %p243 = scmp.ne.s32.totalorder %s232, %s235
      %p244 = scmp.eq.s32.totalorder %s29, 3
      %p245 = por %p243, %p244
      %p246 = scmp.ne.s32.totalorder %s235, %s236
      %p247 = scmp.eq.s32.totalorder %s29, 0
      %p248 = por %p246, %p247
      %p249 = scmp.ne.s32.totalorder %s235, %s236
      %p250 = scmp.eq.s32.totalorder %s30, 3
      %p251 = por %p249, %p250
      %p253 = scmp.ne.s32.totalorder %s236, %s252
      %p254 = scmp.eq.s32.totalorder %s30, 0
      %p255 = por %p253, %p254
      %p256 = scmp.le.s32.totalorder 1, %s24
      %p257 = scmp.lt.s32.totalorder %s24, 5
      %p258 = pnand %p256, %p257
      %p259 = pneg %p258
      // Predicated region
      $region9: #{mixffn_forward.3} parent=5 // pred_check
        _
      $region10: #{mixffn_forward.3} parent=5 // pred_check_branch
        %261 = sbr.rel (%p258) target = $region12
      $region11: #{mixffn_forward.3} parent=5 // pred_region
        %s262 = ssub.s32 %s24, 1
        // Predicated region
        $region13: #{mixffn_forward.3} parent=11 // pred_check
          %p263 = pneg %p157
        $region14: #{mixffn_forward.3} parent=11 // pred_check_branch
          %265 = sbr.rel (%p263) target = $region16
        $region15: #{mixffn_forward.3} parent=11 // pred_region
          %s267 = ssub.s32 192, 192
          %268 = vsyncadd [#allocation9], %s267
          %s269 = sshll.u32 [#allocation8], 4
          %s270 = int_to_ptr.vmem [resolvable:$true] %s269
          %275 = dma.hbm_to_vmem [thread:$0]  %s3, 192, %s270, [#allocation9], 64, 64, 4
        $region16: #{mixffn_forward.3} parent=11 // pred_fallthru
          _
        // Predicated region
        $region17: #{mixffn_forward.3} parent=11 // pred_check
          %p276 = pneg %p178
        $region18: #{mixffn_forward.3} parent=11 // pred_check_branch
          %278 = sbr.rel (%p276) target = $region20
        $region19: #{mixffn_forward.3} parent=11 // pred_region
          %s280 = ssub.s32 16, 16
          %281 = vsyncadd [#allocation9], %s280
          %s283 = sshll.u32 [#allocation10], 4
          %s284 = int_to_ptr.vmem [resolvable:$true] %s283
          %286 = dma.hbm_to_vmem [thread:$0]  %s4, 16, %s284, [#allocation9]
        $region20: #{mixffn_forward.3} parent=11 // pred_fallthru
          _
        // Predicated region
        $region21: #{mixffn_forward.3} parent=11 // pred_check
          %p287 = pneg %p199
        $region22: #{mixffn_forward.3} parent=11 // pred_check_branch
          %289 = sbr.rel (%p287) target = $region24
        $region23: #{mixffn_forward.3} parent=11 // pred_region
          %s291 = ssub.s32 1024, 1024
          %292 = vsyncadd [#allocation12], %s291
          %s293 = sshll.u32 [#allocation11], 4
          %s294 = int_to_ptr.vmem [resolvable:$true] %s293
          %299 = dma.hbm_to_vmem [thread:$0]  %s5, 1024, %s294, [#allocation12], 64, 64, 4
        $region24: #{mixffn_forward.3} parent=11 // pred_fallthru
          _
        // Predicated region
        $region25: #{mixffn_forward.3} parent=11 // pred_check
          %p300 = pneg %p220
        $region26: #{mixffn_forward.3} parent=11 // pred_check_branch
          %302 = sbr.rel (%p300) target = $region28
        $region27: #{mixffn_forward.3} parent=11 // pred_region
          %s304 = ssub.s32 16, 16
          %305 = vsyncadd [#allocation12], %s304
          %s307 = sshll.u32 [#allocation13], 4
          %s308 = int_to_ptr.vmem [resolvable:$true] %s307
          %310 = dma.hbm_to_vmem [thread:$0]  %s6, 16, %s308, [#allocation12]
        $region28: #{mixffn_forward.3} parent=11 // pred_fallthru
          _
      $region12: #{mixffn_forward.3} parent=5 // pred_fallthru
        _
      %p311 = scmp.lt.s32.totalorder %s24, 4
      // Predicated region
      $region29: #{mixffn_forward.3} parent=5 // pred_check
        %p312 = pneg %p311
      $region30: #{mixffn_forward.3} parent=5 // pred_check_branch
        %314 = sbr.rel (%p312) target = $region32
      $region31: #{mixffn_forward.3} parent=5 // pred_region
        // Predicated region
        $region33: #{mixffn_forward.3} parent=31 // pred_check
          %p315 = pneg %p58
        $region34: #{mixffn_forward.3} parent=31 // pred_check_branch
          %317 = sbr.rel (%p315) target = $region36
        $region35: #{mixffn_forward.3} parent=31 // pred_region
          %s318 = sand.u32 %s48, 1
          %s319 = scalar_lea.sflag [#allocation3], %s318
          %s320 = sand.u32 %s48, 1
          %s321 = smul.addr %s320, 64
          %s322 = scalar_lea.vmem [#allocation2], %s321
          %s323 = smul.u32 8, %s32
          %s325 = ssub.s32 1024, 1024
          %326 = vsyncadd %s319, %s325
          %s327 = smul.addr %s323, 2
          %s328 = smul.addr %s31, 32
          %s329 = sadd.s32 %s327, %s328
          %s330 = smul.addr %s329, 64
          %s331 = scalar_lea.hbm %s0, %s330
          %s332 = sshll.u32 %s322, 4
          %s333 = int_to_ptr.vmem [resolvable:$true] %s332
          %338 = dma.hbm_to_vmem [thread:$0]  %s331, 1024, %s333, %s319, 64, 64, 4
        $region36: #{mixffn_forward.3} parent=31 // pred_fallthru
          _
        // Predicated region
        $region37: #{mixffn_forward.3} parent=31 // pred_check
          %p339 = pneg %p94
        $region38: #{mixffn_forward.3} parent=31 // pred_check_branch
          %341 = sbr.rel (%p339) target = $region40
        $region39: #{mixffn_forward.3} parent=31 // pred_region
          %s342 = sand.u32 %s24, 1
          %s343 = scalar_lea.sflag [#allocation6], %s342
          %s344 = sand.u32 %s84, 1
          %s345 = smul.addr %s344, 8
          %s346 = scalar_lea.vmem [#allocation5], %s345
          %s347 = smul.u32 %s32, 8
          %s348 = ssub.s32 %s347, 1
          %p349 = scmp.gt.s32.totalorder %s348, 0
          %s350 = scalar_select %p349, %s348, 0
          %s352 = ssub.s32 128, 128
          %353 = vsyncadd %s343, %s352
          %s354 = smul.addr %s350, 2
          %s355 = smul.addr %s31, 32
          %s356 = sadd.s32 %s354, %s355
          %s357 = smul.addr %s356, 64
          %s358 = scalar_lea.hbm %s1, %s357
          %s359 = sshll.u32 %s346, 4
          %s360 = int_to_ptr.vmem [resolvable:$true] %s359
          %365 = dma.hbm_to_vmem [thread:$0]  %s358, 128, %s360, %s343, 64, 64, 4
        $region40: #{mixffn_forward.3} parent=31 // pred_fallthru
          _
        // Predicated region
        $region41: #{mixffn_forward.3} parent=31 // pred_check
          %p366 = pneg %p130
        $region42: #{mixffn_forward.3} parent=31 // pred_check_branch
          %368 = sbr.rel (%p366) target = $region44
        $region43: #{mixffn_forward.3} parent=31 // pred_region
          %s369 = sand.u32 %s24, 1
          %s370 = scalar_lea.sflag [#allocation6], %s369
          %s371 = sand.u32 %s120, 1
          %s372 = smul.addr %s371, 8
          %s373 = scalar_lea.vmem [#allocation7], %s372
          %s374 = sadd.s32 %s32, 1
          %s375 = smul.u32 %s374, 8
          %p376 = scmp.lt.s32.totalorder %s375, 15
          %s377 = scalar_select %p376, %s375, 15
          %s379 = ssub.s32 128, 128
          %380 = vsyncadd %s370, %s379
          %s381 = smul.addr %s377, 2
          %s382 = smul.addr %s31, 32
          %s383 = sadd.s32 %s381, %s382
          %s384 = smul.addr %s383, 64
          %s385 = scalar_lea.hbm %s2, %s384
          %s386 = sshll.u32 %s373, 4
          %s387 = int_to_ptr.vmem [resolvable:$true] %s386
          %392 = dma.hbm_to_vmem [thread:$0]  %s385, 128, %s387, %s370, 64, 64, 4
        $region44: #{mixffn_forward.3} parent=31 // pred_fallthru
          _
      $region32: #{mixffn_forward.3} parent=5 // pred_fallthru
        _
      %p393 = scmp.le.s32.totalorder 1, %s24
      %p394 = scmp.lt.s32.totalorder %s24, 5
      %p395 = pnand %p393, %p394
      %p396 = pneg %p395
      // Predicated region
      $region45: #{mixffn_forward.3} parent=5 // pred_check
        _
      $region46: #{mixffn_forward.3} parent=5 // pred_check_branch
        %398 = sbr.rel (%p395) target = $region48
      $region47: #{mixffn_forward.3} parent=5 // pred_region
        %s399 = ssub.s32 %s24, 1
        %s400 = sand.u32 %s51, 1
        %s401 = scalar_lea.sflag [#allocation3], %s400
        %s402 = sand.u32 %s51, 1
        %s403 = smul.addr %s402, 64
        %s404 = scalar_lea.vmem [#allocation2], %s403
        // Predicated region
        $region49: #{mixffn_forward.3} parent=47 // pred_check
          %p405 = pneg %p64
        $region50: #{mixffn_forward.3} parent=47 // pred_check_branch
          %407 = sbr.rel (%p405) target = $region52
        $region51: #{mixffn_forward.3} parent=47 // pred_region
          %408 = dma.done %s401, 1024
        $region52: #{mixffn_forward.3} parent=47 // pred_fallthru
          _
        %s409 = sand.u32 %s29, 1
        %s410 = scalar_lea.sflag [#allocation6], %s409
        %s411 = sand.u32 %s87, 1
        %s412 = smul.addr %s411, 8
        %s413 = scalar_lea.vmem [#allocation5], %s412
        // Predicated region
        $region53: #{mixffn_forward.3} parent=47 // pred_check
          %p414 = pneg %p100
        $region54: #{mixffn_forward.3} parent=47 // pred_check_branch
          %416 = sbr.rel (%p414) target = $region56
        $region55: #{mixffn_forward.3} parent=47 // pred_region
          %417 = dma.done %s410, 128
        $region56: #{mixffn_forward.3} parent=47 // pred_fallthru
          _
        %s418 = sand.u32 %s29, 1
        %s419 = scalar_lea.sflag [#allocation6], %s418
        %s420 = sand.u32 %s123, 1
        %s421 = smul.addr %s420, 8
        %s422 = scalar_lea.vmem [#allocation7], %s421
        // Predicated region
        $region57: #{mixffn_forward.3} parent=47 // pred_check
          %p423 = pneg %p136
        $region58: #{mixffn_forward.3} parent=47 // pred_check_branch
          %425 = sbr.rel (%p423) target = $region60
        $region59: #{mixffn_forward.3} parent=47 // pred_region
          %426 = dma.done %s419, 128
        $region60: #{mixffn_forward.3} parent=47 // pred_fallthru
          _
        // Predicated region
        $region61: #{mixffn_forward.3} parent=47 // pred_check
          %p427 = pneg %p157
        $region62: #{mixffn_forward.3} parent=47 // pred_check_branch
          %429 = sbr.rel (%p427) target = $region64
        $region63: #{mixffn_forward.3} parent=47 // pred_region
          %430 = dma.done [#allocation9], 192
        $region64: #{mixffn_forward.3} parent=47 // pred_fallthru
          _
        // Predicated region
        $region65: #{mixffn_forward.3} parent=47 // pred_check
          %p431 = pneg %p178
        $region66: #{mixffn_forward.3} parent=47 // pred_check_branch
          %433 = sbr.rel (%p431) target = $region68
        $region67: #{mixffn_forward.3} parent=47 // pred_region
          %434 = dma.done [#allocation9], 16
        $region68: #{mixffn_forward.3} parent=47 // pred_fallthru
          _
        // Predicated region
        $region69: #{mixffn_forward.3} parent=47 // pred_check
          %p435 = pneg %p199
        $region70: #{mixffn_forward.3} parent=47 // pred_check_branch
          %437 = sbr.rel (%p435) target = $region72
        $region71: #{mixffn_forward.3} parent=47 // pred_region
          %438 = dma.done [#allocation12], 1024
        $region72: #{mixffn_forward.3} parent=47 // pred_fallthru
          _
        // Predicated region
        $region73: #{mixffn_forward.3} parent=47 // pred_check
          %p439 = pneg %p220
        $region74: #{mixffn_forward.3} parent=47 // pred_check_branch
          %441 = sbr.rel (%p439) target = $region76
        $region75: #{mixffn_forward.3} parent=47 // pred_region
          %442 = dma.done [#allocation12], 16
        $region76: #{mixffn_forward.3} parent=47 // pred_fallthru
          _
        %s443 = sand.u32 %s51, 1
        %s444 = scalar_lea.sflag [#allocation3], %s443
        %s445 = sand.u32 %s51, 1
        %s446 = smul.addr %s445, 64
        %s447 = scalar_lea.vmem [#allocation2], %s446
        %p448 = pneg %p64
        %p449 = pneg %p61
        %s450 = sand.u32 %s29, 1
        %s451 = scalar_lea.sflag [#allocation6], %s450
        %s452 = sand.u32 %s87, 1
        %s453 = smul.addr %s452, 8
        %s454 = scalar_lea.vmem [#allocation5], %s453
        %p455 = pneg %p100
        %p456 = pneg %p97
        %s457 = sand.u32 %s29, 1
        %s458 = scalar_lea.sflag [#allocation6], %s457
        %s459 = sand.u32 %s123, 1
        %s460 = smul.addr %s459, 8
        %s461 = scalar_lea.vmem [#allocation7], %s460
        %p462 = pneg %p136
        %p463 = pneg %p133
        %p464 = pneg %p157
        %p465 = pneg %p154
        %p466 = pneg %p178
        %p467 = pneg %p175
        %p468 = pneg %p199
        %p469 = pneg %p196
        %p470 = pneg %p220
        %p471 = pneg %p217
        %p472 = pneg %p248
        %p473 = pneg %p245
        %s474 = sand.u32 %s235, 1
        %s475 = scalar_lea.sflag [#allocation4], %s474
        %s476 = sand.u32 %s235, 1
        %s477 = smul.addr %s476, 128
        %s478 = scalar_lea.vmem [#allocation14], %s477
        %s479 = smul.u32 8, %s34
        %s480 = smul.u32 %s34, 8
        %s481 = ssub.s32 %s480, 1
        %p482 = scmp.gt.s32.totalorder %s481, 0
        %s483 = scalar_select %p482, %s481, 0
        %s484 = sadd.s32 %s34, 1
        %s485 = smul.u32 %s484, 8
        %p486 = scmp.lt.s32.totalorder %s485, 15
        %s487 = scalar_select %p486, %s485, 15
        %s488 = smul.u32 8, %s34
        %p490 = scmp.gt.s32.totalorder %s34, 0
        %v491 = vld [vmem:[%s413] sm:$0xf]
        %v492 = vld [vmem:[%s413 + $0x4] sm:$0xf]
        %v493 = vunpack.c.l.bf16 %v491
        %v494 = vunpack.c.l.bf16 %v492
        %s495 = scalar_select %p490, 1, 0
        %v496 = vstv %s495
        %vm497 = vcmp.eq.s32.totalorder %v496, 1
        %v498 = vsel %vm497, %v493, 0.0
        %v499 = vsel %vm497, %v494, 0.0
        %p500 = scmp.lt.s32.totalorder %s34, 1
        %v501 = vld [vmem:[%s422] sm:$0xf]
        %v502 = vld [vmem:[%s422 + $0x4] sm:$0xf]
        %v503 = vunpack.c.l.bf16 %v501
        %v504 = vunpack.c.l.bf16 %v502
        %s505 = scalar_select %p500, 1, 0
        %v506 = vstv %s505
        %vm507 = vcmp.eq.s32.totalorder %v506, 1
        %v508 = vsel %vm507, %v503, 0.0
        %v509 = vsel %vm507, %v504, 0.0
        %v510 = vld [vmem:[%s404] sm:$0xf]
        %v511 = vld [vmem:[%s404 + $0x4] sm:$0xf]
        %v512 = vld [vmem:[%s404 + $0x8] sm:$0xf]
        %v513 = vld [vmem:[%s404 + $0xc] sm:$0xf]
        %v514 = vld [vmem:[%s404 + $0x10] sm:$0xf]
        %v515 = vld [vmem:[%s404 + $0x14] sm:$0xf]
        %v516 = vld [vmem:[%s404 + $0x18] sm:$0xf]
        %v517 = vld [vmem:[%s404 + $0x1c] sm:$0xf]
        %v518 = vld [vmem:[%s404 + $0x20] sm:$0xf]
        %v519 = vld [vmem:[%s404 + $0x24] sm:$0xf]
        %v520 = vld [vmem:[%s404 + $0x28] sm:$0xf]
        %v521 = vld [vmem:[%s404 + $0x2c] sm:$0xf]
        %v522 = vld [vmem:[%s404 + $0x30] sm:$0xf]
        %v523 = vld [vmem:[%s404 + $0x34] sm:$0xf]
        %v524 = vld [vmem:[%s404 + $0x38] sm:$0xf]
        %v525 = vld [vmem:[%s404 + $0x3c] sm:$0xf]
        %v526 = vunpack.c.l.bf16 %v510
        %v527 = vunpack.c.l.bf16 %v511
        %v528 = vunpack.c.l.bf16 %v512
        %v529 = vunpack.c.l.bf16 %v513
        %v530 = vunpack.c.l.bf16 %v514
        %v531 = vunpack.c.l.bf16 %v515
        %v532 = vunpack.c.l.bf16 %v516
        %v533 = vunpack.c.l.bf16 %v517
        %v534 = vunpack.c.l.bf16 %v518
        %v535 = vunpack.c.l.bf16 %v519
        %v536 = vunpack.c.l.bf16 %v520
        %v537 = vunpack.c.l.bf16 %v521
        %v538 = vunpack.c.l.bf16 %v522
        %v539 = vunpack.c.l.bf16 %v523
        %v540 = vunpack.c.l.bf16 %v524
        %v541 = vunpack.c.l.bf16 %v525
        %vm562 = vcmask 1040384
        %v563 = vrot.slane %v498, 7
        %v564 = vrot.slane %v499, 7
        %v565 = vsel %vm562, %v563, %v564
        %v566 = vrot.slane %v526, 7
        %v567 = vrot.slane %v527, 7
        %v568 = vsel %vm562, %v566, %v567
        %v569 = vrot.slane %v528, 7
        %v570 = vrot.slane %v529, 7
        %v571 = vsel %vm562, %v569, %v570
        %v572 = vrot.slane %v530, 7
        %v573 = vrot.slane %v531, 7
        %v574 = vsel %vm562, %v572, %v573
        %v575 = vrot.slane %v532, 7
        %v576 = vrot.slane %v533, 7
        %v577 = vsel %vm562, %v575, %v576
        %v578 = vrot.slane %v534, 7
        %v579 = vrot.slane %v535, 7
        %v580 = vsel %vm562, %v578, %v579
        %v581 = vrot.slane %v536, 7
        %v582 = vrot.slane %v537, 7
        %v583 = vsel %vm562, %v581, %v582
        %v584 = vrot.slane %v538, 7
        %v585 = vrot.slane %v539, 7
        %v586 = vsel %vm562, %v584, %v585
        %v587 = vrot.slane %v540, 7
        %v588 = vrot.slane %v541, 7
        %v589 = vsel %vm562, %v587, %v588
        %v590 = vrot.slane %v508, 7
        %v591 = vrot.slane %v509, 7
        %v592 = vsel %vm562, %v590, %v591
        %v613 = vsel %vm562, 0.0, %v563
        %v614 = vsel %vm562, 0.0, %v566
        %v615 = vsel %vm562, 0.0, %v569
        %v616 = vsel %vm562, 0.0, %v572
        %v617 = vsel %vm562, 0.0, %v575
        %v618 = vsel %vm562, 0.0, %v578
        %v619 = vsel %vm562, 0.0, %v581
        %v620 = vsel %vm562, 0.0, %v584
        %v621 = vsel %vm562, 0.0, %v587
        %v622 = vsel %vm562, 0.0, %v590
        %vm623 = vcmask 1046528
        %v624 = vrot.slane %v498, 1
        %v625 = vrot.slane %v499, 1
        %v626 = vsel %vm623, %v624, %v625
        %v627 = vrot.slane %v526, 1
        %v628 = vrot.slane %v527, 1
        %v629 = vsel %vm623, %v627, %v628
        %v630 = vrot.slane %v528, 1
        %v631 = vrot.slane %v529, 1
        %v632 = vsel %vm623, %v630, %v631
        %v633 = vrot.slane %v530, 1
        %v634 = vrot.slane %v531, 1
        %v635 = vsel %vm623, %v633, %v634
        %v636 = vrot.slane %v532, 1
        %v637 = vrot.slane %v533, 1
        %v638 = vsel %vm623, %v636, %v637
        %v639 = vrot.slane %v534, 1
        %v640 = vrot.slane %v535, 1
        %v641 = vsel %vm623, %v639, %v640
        %v642 = vrot.slane %v536, 1
        %v643 = vrot.slane %v537, 1
        %v644 = vsel %vm623, %v642, %v643
        %v645 = vrot.slane %v538, 1
        %v646 = vrot.slane %v539, 1
        %v647 = vsel %vm623, %v645, %v646
        %v648 = vrot.slane %v540, 1
        %v649 = vrot.slane %v541, 1
        %v650 = vsel %vm623, %v648, %v649
        %v651 = vrot.slane %v508, 1
        %v652 = vrot.slane %v509, 1
        %v653 = vsel %vm623, %v651, %v652
        %v674 = vsel %vm623, %v625, 0.0
        %v675 = vsel %vm623, %v628, 0.0
        %v676 = vsel %vm623, %v631, 0.0
        %v677 = vsel %vm623, %v634, 0.0
        %v678 = vsel %vm623, %v637, 0.0
        %v679 = vsel %vm623, %v640, 0.0
        %v680 = vsel %vm623, %v643, 0.0
        %v681 = vsel %vm623, %v646, 0.0
        %v682 = vsel %vm623, %v649, 0.0
        %v683 = vsel %vm623, %v652, 0.0
        %v684 = vld [vmem:[#allocation8] sm:$0x7]
        %v685 = vld [vmem:[#allocation8 + $0x4] sm:$0x7]
        %v686 = vld [vmem:[#allocation8 + $0x8] sm:$0x7]
        %v687 = vlaneseq
        %v688 = vshrl.u32 %v687, 7
        %v689 = vsub.s32 0, %v688
        %v690 = vrot.slane %v684, %v689
        %v691 = vmul.f32 %v613, %v690
        %v692 = vmul.f32 %v565, %v690
        %v693 = vmul.f32 %v614, %v690
        %v694 = vmul.f32 %v568, %v690
        %v695 = vmul.f32 %v615, %v690
        %v696 = vmul.f32 %v571, %v690
        %v697 = vmul.f32 %v616, %v690
        %v698 = vmul.f32 %v574, %v690
        %v699 = vmul.f32 %v617, %v690
        %v700 = vmul.f32 %v577, %v690
        %v701 = vmul.f32 %v618, %v690
        %v702 = vmul.f32 %v580, %v690
        %v703 = vmul.f32 %v619, %v690
        %v704 = vmul.f32 %v583, %v690
        %v705 = vmul.f32 %v620, %v690
        %v706 = vmul.f32 %v586, %v690
        %v707 = vadd.f32 %v691, 0.0
        %v708 = vadd.f32 %v692, 0.0
        %v709 = vadd.f32 %v693, 0.0
        %v710 = vadd.f32 %v694, 0.0
        %v711 = vadd.f32 %v695, 0.0
        %v712 = vadd.f32 %v696, 0.0
        %v713 = vadd.f32 %v697, 0.0
        %v714 = vadd.f32 %v698, 0.0
        %v715 = vadd.f32 %v699, 0.0
        %v716 = vadd.f32 %v700, 0.0
        %v717 = vadd.f32 %v701, 0.0
        %v718 = vadd.f32 %v702, 0.0
        %v719 = vadd.f32 %v703, 0.0
        %v720 = vadd.f32 %v704, 0.0
        %v721 = vadd.f32 %v705, 0.0
        %v722 = vadd.f32 %v706, 0.0
        %v723 = vlaneseq
        %v724 = vshrl.u32 %v723, 7
        %v725 = vsub.s32 1, %v724
        %v726 = vrot.slane %v684, %v725
        %v727 = vmul.f32 %v498, %v726
        %v728 = vmul.f32 %v499, %v726
        %v729 = vmul.f32 %v526, %v726
        %v730 = vmul.f32 %v527, %v726
        %v731 = vmul.f32 %v528, %v726
        %v732 = vmul.f32 %v529, %v726
        %v733 = vmul.f32 %v530, %v726
        %v734 = vmul.f32 %v531, %v726
        %v735 = vmul.f32 %v532, %v726
        %v736 = vmul.f32 %v533, %v726
        %v737 = vmul.f32 %v534, %v726
        %v738 = vmul.f32 %v535, %v726
        %v739 = vmul.f32 %v536, %v726
        %v740 = vmul.f32 %v537, %v726
        %v741 = vmul.f32 %v538, %v726
        %v742 = vmul.f32 %v539, %v726
        %v743 = vadd.f32 %v707, %v727
        %v744 = vadd.f32 %v708, %v728
        %v745 = vadd.f32 %v709, %v729
        %v746 = vadd.f32 %v710, %v730
        %v747 = vadd.f32 %v711, %v731
        %v748 = vadd.f32 %v712, %v732
        %v749 = vadd.f32 %v713, %v733
        %v750 = vadd.f32 %v714, %v734
        %v751 = vadd.f32 %v715, %v735
        %v752 = vadd.f32 %v716, %v736
        %v753 = vadd.f32 %v717, %v737
        %v754 = vadd.f32 %v718, %v738
        %v755 = vadd.f32 %v719, %v739
        %v756 = vadd.f32 %v720, %v740
        %v757 = vadd.f32 %v721, %v741
        %v758 = vadd.f32 %v722, %v742
        %v759 = vlaneseq
        %v760 = vshrl.u32 %v759, 7
        %v761 = vsub.s32 2, %v760
        %v762 = vrot.slane %v684, %v761
        %v763 = vmul.f32 %v626, %v762
        %v764 = vmul.f32 %v674, %v762
        %v765 = vmul.f32 %v629, %v762
        %v766 = vmul.f32 %v675, %v762
        %v767 = vmul.f32 %v632, %v762
        %v768 = vmul.f32 %v676, %v762
        %v769 = vmul.f32 %v635, %v762
        %v770 = vmul.f32 %v677, %v762
        %v771 = vmul.f32 %v638, %v762
        %v772 = vmul.f32 %v678, %v762
        %v773 = vmul.f32 %v641, %v762
        %v774 = vmul.f32 %v679, %v762
        %v775 = vmul.f32 %v644, %v762
        %v776 = vmul.f32 %v680, %v762
        %v777 = vmul.f32 %v647, %v762
        %v778 = vmul.f32 %v681, %v762
        %v779 = vadd.f32 %v743, %v763
        %v780 = vadd.f32 %v744, %v764
        %v781 = vadd.f32 %v745, %v765
        %v782 = vadd.f32 %v746, %v766
        %v783 = vadd.f32 %v747, %v767
        %v784 = vadd.f32 %v748, %v768
        %v785 = vadd.f32 %v749, %v769
        %v786 = vadd.f32 %v750, %v770
        %v787 = vadd.f32 %v751, %v771
        %v788 = vadd.f32 %v752, %v772
        %v789 = vadd.f32 %v753, %v773
        %v790 = vadd.f32 %v754, %v774
        %v791 = vadd.f32 %v755, %v775
        %v792 = vadd.f32 %v756, %v776
        %v793 = vadd.f32 %v757, %v777
        %v794 = vadd.f32 %v758, %v778
        %v795 = vlaneseq
        %v796 = vshrl.u32 %v795, 7
        %v797 = vsub.s32 0, %v796
        %v798 = vrot.slane %v685, %v797
        %v799 = vmul.f32 %v614, %v798
        %v800 = vmul.f32 %v568, %v798
        %v801 = vmul.f32 %v615, %v798
        %v802 = vmul.f32 %v571, %v798
        %v803 = vmul.f32 %v616, %v798
        %v804 = vmul.f32 %v574, %v798
        %v805 = vmul.f32 %v617, %v798
        %v806 = vmul.f32 %v577, %v798
        %v807 = vmul.f32 %v618, %v798
        %v808 = vmul.f32 %v580, %v798
        %v809 = vmul.f32 %v619, %v798
        %v810 = vmul.f32 %v583, %v798
        %v811 = vmul.f32 %v620, %v798
        %v812 = vmul.f32 %v586, %v798
        %v813 = vmul.f32 %v621, %v798
        %v814 = vmul.f32 %v589, %v798
        %v815 = vadd.f32 %v779, %v799
        %v816 = vadd.f32 %v780, %v800
        %v817 = vadd.f32 %v781, %v801
        %v818 = vadd.f32 %v782, %v802
        %v819 = vadd.f32 %v783, %v803
        %v820 = vadd.f32 %v784, %v804
        %v821 = vadd.f32 %v785, %v805
        %v822 = vadd.f32 %v786, %v806
        %v823 = vadd.f32 %v787, %v807
        %v824 = vadd.f32 %v788, %v808
        %v825 = vadd.f32 %v789, %v809
        %v826 = vadd.f32 %v790, %v810
        %v827 = vadd.f32 %v791, %v811
        %v828 = vadd.f32 %v792, %v812
        %v829 = vadd.f32 %v793, %v813
        %v830 = vadd.f32 %v794, %v814
        %v831 = vlaneseq
        %v832 = vshrl.u32 %v831, 7
        %v833 = vsub.s32 1, %v832
        %v834 = vrot.slane %v685, %v833
        %v835 = vmul.f32 %v526, %v834
        %v836 = vmul.f32 %v527, %v834
        %v837 = vmul.f32 %v528, %v834
        %v838 = vmul.f32 %v529, %v834
        %v839 = vmul.f32 %v530, %v834
        %v840 = vmul.f32 %v531, %v834
        %v841 = vmul.f32 %v532, %v834
        %v842 = vmul.f32 %v533, %v834
        %v843 = vmul.f32 %v534, %v834
        %v844 = vmul.f32 %v535, %v834
        %v845 = vmul.f32 %v536, %v834
        %v846 = vmul.f32 %v537, %v834
        %v847 = vmul.f32 %v538, %v834
        %v848 = vmul.f32 %v539, %v834
        %v849 = vmul.f32 %v540, %v834
        %v850 = vmul.f32 %v541, %v834
        %v851 = vadd.f32 %v815, %v835
        %v852 = vadd.f32 %v816, %v836
        %v853 = vadd.f32 %v817, %v837
        %v854 = vadd.f32 %v818, %v838
        %v855 = vadd.f32 %v819, %v839
        %v856 = vadd.f32 %v820, %v840
        %v857 = vadd.f32 %v821, %v841
        %v858 = vadd.f32 %v822, %v842
        %v859 = vadd.f32 %v823, %v843
        %v860 = vadd.f32 %v824, %v844
        %v861 = vadd.f32 %v825, %v845
        %v862 = vadd.f32 %v826, %v846
        %v863 = vadd.f32 %v827, %v847
        %v864 = vadd.f32 %v828, %v848
        %v865 = vadd.f32 %v829, %v849
        %v866 = vadd.f32 %v830, %v850
        %v867 = vlaneseq
        %v868 = vshrl.u32 %v867, 7
        %v869 = vsub.s32 2, %v868
        %v870 = vrot.slane %v685, %v869
        %v871 = vmul.f32 %v629, %v870
        %v872 = vmul.f32 %v675, %v870
        %v873 = vmul.f32 %v632, %v870
        %v874 = vmul.f32 %v676, %v870
        %v875 = vmul.f32 %v635, %v870
        %v876 = vmul.f32 %v677, %v870
        %v877 = vmul.f32 %v638, %v870
        %v878 = vmul.f32 %v678, %v870
        %v879 = vmul.f32 %v641, %v870
        %v880 = vmul.f32 %v679, %v870
        %v881 = vmul.f32 %v644, %v870
        %v882 = vmul.f32 %v680, %v870
        %v883 = vmul.f32 %v647, %v870
        %v884 = vmul.f32 %v681, %v870
        %v885 = vmul.f32 %v650, %v870
        %v886 = vmul.f32 %v682, %v870
        %v887 = vadd.f32 %v851, %v871
        %v888 = vadd.f32 %v852, %v872
        %v889 = vadd.f32 %v853, %v873
        %v890 = vadd.f32 %v854, %v874
        %v891 = vadd.f32 %v855, %v875
        %v892 = vadd.f32 %v856, %v876
        %v893 = vadd.f32 %v857, %v877
        %v894 = vadd.f32 %v858, %v878
        %v895 = vadd.f32 %v859, %v879
        %v896 = vadd.f32 %v860, %v880
        %v897 = vadd.f32 %v861, %v881
        %v898 = vadd.f32 %v862, %v882
        %v899 = vadd.f32 %v863, %v883
        %v900 = vadd.f32 %v864, %v884
        %v901 = vadd.f32 %v865, %v885
        %v902 = vadd.f32 %v866, %v886
        %v903 = vlaneseq
        %v904 = vshrl.u32 %v903, 7
        %v905 = vsub.s32 0, %v904
        %v906 = vrot.slane %v686, %v905
        %v907 = vmul.f32 %v615, %v906
        %v908 = vmul.f32 %v571, %v906
        %v909 = vmul.f32 %v616, %v906
        %v910 = vmul.f32 %v574, %v906
        %v911 = vmul.f32 %v617, %v906
        %v912 = vmul.f32 %v577, %v906
        %v913 = vmul.f32 %v618, %v906
        %v914 = vmul.f32 %v580, %v906
        %v915 = vmul.f32 %v619, %v906
        %v916 = vmul.f32 %v583, %v906
        %v917 = vmul.f32 %v620, %v906
        %v918 = vmul.f32 %v586, %v906
        %v919 = vmul.f32 %v621, %v906
        %v920 = vmul.f32 %v589, %v906
        %v921 = vmul.f32 %v622, %v906
        %v922 = vmul.f32 %v592, %v906
        %v923 = vadd.f32 %v887, %v907
        %v924 = vadd.f32 %v888, %v908
        %v925 = vadd.f32 %v889, %v909
        %v926 = vadd.f32 %v890, %v910
        %v927 = vadd.f32 %v891, %v911
        %v928 = vadd.f32 %v892, %v912
        %v929 = vadd.f32 %v893, %v913
        %v930 = vadd.f32 %v894, %v914
        %v931 = vadd.f32 %v895, %v915
        %v932 = vadd.f32 %v896, %v916
        %v933 = vadd.f32 %v897, %v917
        %v934 = vadd.f32 %v898, %v918
        %v935 = vadd.f32 %v899, %v919
        %v936 = vadd.f32 %v900, %v920
        %v937 = vadd.f32 %v901, %v921
        %v938 = vadd.f32 %v902, %v922
        %v939 = vlaneseq
        %v940 = vshrl.u32 %v939, 7
        %v941 = vsub.s32 1, %v940
        %v942 = vrot.slane %v686, %v941
        %v943 = vmul.f32 %v528, %v942
        %v944 = vmul.f32 %v529, %v942
        %v945 = vmul.f32 %v530, %v942
        %v946 = vmul.f32 %v531, %v942
        %v947 = vmul.f32 %v532, %v942
        %v948 = vmul.f32 %v533, %v942
        %v949 = vmul.f32 %v534, %v942
        %v950 = vmul.f32 %v535, %v942
        %v951 = vmul.f32 %v536, %v942
        %v952 = vmul.f32 %v537, %v942
        %v953 = vmul.f32 %v538, %v942
        %v954 = vmul.f32 %v539, %v942
        %v955 = vmul.f32 %v540, %v942
        %v956 = vmul.f32 %v541, %v942
        %v957 = vmul.f32 %v508, %v942
        %v958 = vmul.f32 %v509, %v942
        %v959 = vadd.f32 %v923, %v943
        %v960 = vadd.f32 %v924, %v944
        %v961 = vadd.f32 %v925, %v945
        %v962 = vadd.f32 %v926, %v946
        %v963 = vadd.f32 %v927, %v947
        %v964 = vadd.f32 %v928, %v948
        %v965 = vadd.f32 %v929, %v949
        %v966 = vadd.f32 %v930, %v950
        %v967 = vadd.f32 %v931, %v951
        %v968 = vadd.f32 %v932, %v952
        %v969 = vadd.f32 %v933, %v953
        %v970 = vadd.f32 %v934, %v954
        %v971 = vadd.f32 %v935, %v955
        %v972 = vadd.f32 %v936, %v956
        %v973 = vadd.f32 %v937, %v957
        %v974 = vadd.f32 %v938, %v958
        %v975 = vlaneseq
        %v976 = vshrl.u32 %v975, 7
        %v977 = vsub.s32 2, %v976
        %v978 = vrot.slane %v686, %v977
        %v979 = vmul.f32 %v632, %v978
        %v980 = vmul.f32 %v676, %v978
        %v981 = vmul.f32 %v635, %v978
        %v982 = vmul.f32 %v677, %v978
        %v983 = vmul.f32 %v638, %v978
        %v984 = vmul.f32 %v678, %v978
        %v985 = vmul.f32 %v641, %v978
        %v986 = vmul.f32 %v679, %v978
        %v987 = vmul.f32 %v644, %v978
        %v988 = vmul.f32 %v680, %v978
        %v989 = vmul.f32 %v647, %v978
        %v990 = vmul.f32 %v681, %v978
        %v991 = vmul.f32 %v650, %v978
        %v992 = vmul.f32 %v682, %v978
        %v993 = vmul.f32 %v653, %v978
        %v994 = vmul.f32 %v683, %v978
        %v995 = vadd.f32 %v959, %v979
        %v996 = vadd.f32 %v960, %v980
        %v997 = vadd.f32 %v961, %v981
        %v998 = vadd.f32 %v962, %v982
        %v999 = vadd.f32 %v963, %v983
        %v1000 = vadd.f32 %v964, %v984
        %v1001 = vadd.f32 %v965, %v985
        %v1002 = vadd.f32 %v966, %v986
        %v1003 = vadd.f32 %v967, %v987
        %v1004 = vadd.f32 %v968, %v988
        %v1005 = vadd.f32 %v969, %v989
        %v1006 = vadd.f32 %v970, %v990
        %v1007 = vadd.f32 %v971, %v991
        %v1008 = vadd.f32 %v972, %v992
        %v1009 = vadd.f32 %v973, %v993
        %v1010 = vadd.f32 %v974, %v994
        %v1011 = vld [vmem:[#allocation10] sm:$0x1]
        %v1013 = vlaneseq
        %v1014 = vshrl.u32 %v1013, 7
        %v1015 = vsub.s32 0, %v1014
        %v1016 = vrot.slane %v1011, %v1015
        %v1018 = vadd.f32 %v995, %v1016
        %v1019 = vadd.f32 %v996, %v1016
        %v1020 = vadd.f32 %v997, %v1016
        %v1021 = vadd.f32 %v998, %v1016
        %v1022 = vadd.f32 %v999, %v1016
        %v1023 = vadd.f32 %v1000, %v1016
        %v1024 = vadd.f32 %v1001, %v1016
        %v1025 = vadd.f32 %v1002, %v1016
        %v1026 = vadd.f32 %v1003, %v1016
        %v1027 = vadd.f32 %v1004, %v1016
        %v1028 = vadd.f32 %v1005, %v1016
        %v1029 = vadd.f32 %v1006, %v1016
        %v1030 = vadd.f32 %v1007, %v1016
        %v1031 = vadd.f32 %v1008, %v1016
        %v1032 = vadd.f32 %v1009, %v1016
        %v1033 = vadd.f32 %v1010, %v1016
        %v1034 = vmul.f32 %v1018, 0.5
        %v1035 = vmul.f32 %v1019, 0.5
        %v1036 = vmul.f32 %v1020, 0.5
        %v1037 = vmul.f32 %v1021, 0.5
        %v1038 = vmul.f32 %v1022, 0.5
        %v1039 = vmul.f32 %v1023, 0.5
        %v1040 = vmul.f32 %v1024, 0.5
        %v1041 = vmul.f32 %v1025, 0.5
        %v1042 = vmul.f32 %v1026, 0.5
        %v1043 = vmul.f32 %v1027, 0.5
        %v1044 = vmul.f32 %v1028, 0.5
        %v1045 = vmul.f32 %v1029, 0.5
        %v1046 = vmul.f32 %v1030, 0.5
        %v1047 = vmul.f32 %v1031, 0.5
        %v1048 = vmul.f32 %v1032, 0.5
        %v1049 = vmul.f32 %v1033, 0.5
        %v1050 = vmul.f32 %v1018, 0.70710677
        %v1051 = vmul.f32 %v1019, 0.70710677
        %v1052 = vmul.f32 %v1020, 0.70710677
        %v1053 = vmul.f32 %v1021, 0.70710677
        %v1054 = vmul.f32 %v1022, 0.70710677
        %v1055 = vmul.f32 %v1023, 0.70710677
        %v1056 = vmul.f32 %v1024, 0.70710677
        %v1057 = vmul.f32 %v1025, 0.70710677
        %v1058 = vmul.f32 %v1026, 0.70710677
        %v1059 = vmul.f32 %v1027, 0.70710677
        %v1060 = vmul.f32 %v1028, 0.70710677
        %v1061 = vmul.f32 %v1029, 0.70710677
        %v1062 = vmul.f32 %v1030, 0.70710677
        %v1063 = vmul.f32 %v1031, 0.70710677
        %v1064 = vmul.f32 %v1032, 0.70710677
        %v1065 = vmul.f32 %v1033, 0.70710677
        %v1066 = verf.f32.pop %v1050
        %v1067 = verf.f32.pop %v1051
        %v1068 = verf.f32.pop %v1052
        %v1069 = verf.f32.pop %v1053
        %v1070 = verf.f32.pop %v1054
        %v1071 = verf.f32.pop %v1055
        %v1072 = verf.f32.pop %v1056
        %v1073 = verf.f32.pop %v1057
        %v1074 = verf.f32.pop %v1058
        %v1075 = verf.f32.pop %v1059
        %v1076 = verf.f32.pop %v1060
        %v1077 = verf.f32.pop %v1061
        %v1078 = verf.f32.pop %v1062
        %v1079 = verf.f32.pop %v1063
        %v1080 = verf.f32.pop %v1064
        %v1081 = verf.f32.pop %v1065
        %v1082 = vadd.f32 %v1066, 1.0
        %v1083 = vadd.f32 %v1067, 1.0
        %v1084 = vadd.f32 %v1068, 1.0
        %v1085 = vadd.f32 %v1069, 1.0
        %v1086 = vadd.f32 %v1070, 1.0
        %v1087 = vadd.f32 %v1071, 1.0
        %v1088 = vadd.f32 %v1072, 1.0
        %v1089 = vadd.f32 %v1073, 1.0
        %v1090 = vadd.f32 %v1074, 1.0
        %v1091 = vadd.f32 %v1075, 1.0
        %v1092 = vadd.f32 %v1076, 1.0
        %v1093 = vadd.f32 %v1077, 1.0
        %v1094 = vadd.f32 %v1078, 1.0
        %v1095 = vadd.f32 %v1079, 1.0
        %v1096 = vadd.f32 %v1080, 1.0
        %v1097 = vadd.f32 %v1081, 1.0
        %v1098 = vmul.f32 %v1034, %v1082
        %v1099 = vmul.f32 %v1035, %v1083
        %v1100 = vmul.f32 %v1036, %v1084
        %v1101 = vmul.f32 %v1037, %v1085
        %v1102 = vmul.f32 %v1038, %v1086
        %v1103 = vmul.f32 %v1039, %v1087
        %v1104 = vmul.f32 %v1040, %v1088
        %v1105 = vmul.f32 %v1041, %v1089
        %v1106 = vmul.f32 %v1042, %v1090
        %v1107 = vmul.f32 %v1043, %v1091
        %v1108 = vmul.f32 %v1044, %v1092
        %v1109 = vmul.f32 %v1045, %v1093
        %v1110 = vmul.f32 %v1046, %v1094
        %v1111 = vmul.f32 %v1047, %v1095
        %v1112 = vmul.f32 %v1048, %v1096
        %v1113 = vmul.f32 %v1049, %v1097
        %v1114 = vpack.c.bf16 %v1099, %v1098
        %v1115 = vpack.c.bf16 %v1101, %v1100
        %v1116 = vpack.c.bf16 %v1103, %v1102
        %v1117 = vpack.c.bf16 %v1105, %v1104
        %v1118 = vpack.c.bf16 %v1107, %v1106
        %v1119 = vpack.c.bf16 %v1109, %v1108
        %v1120 = vpack.c.bf16 %v1111, %v1110
        %v1121 = vpack.c.bf16 %v1113, %v1112
        %v1122 = vld [vmem:[#allocation11] sm:$0xf]
        %v1123 = vld [vmem:[#allocation11 + $0x4] sm:$0xf]
        %v1124 = vld [vmem:[#allocation11 + $0x8] sm:$0xf]
        %v1125 = vld [vmem:[#allocation11 + $0xc] sm:$0xf]
        %v1126 = vld [vmem:[#allocation11 + $0x10] sm:$0xf]
        %v1127 = vld [vmem:[#allocation11 + $0x14] sm:$0xf]
        %v1128 = vld [vmem:[#allocation11 + $0x18] sm:$0xf]
        %v1129 = vld [vmem:[#allocation11 + $0x1c] sm:$0xf]
        %v1130 = vld [vmem:[#allocation11 + $0x20] sm:$0xf]
        %v1131 = vld [vmem:[#allocation11 + $0x24] sm:$0xf]
        %v1132 = vld [vmem:[#allocation11 + $0x28] sm:$0xf]
        %v1133 = vld [vmem:[#allocation11 + $0x2c] sm:$0xf]
        %v1134 = vld [vmem:[#allocation11 + $0x30] sm:$0xf]
        %v1135 = vld [vmem:[#allocation11 + $0x34] sm:$0xf]
        %v1136 = vld [vmem:[#allocation11 + $0x38] sm:$0xf]
        %v1137 = vld [vmem:[#allocation11 + $0x3c] sm:$0xf]
        %v1138 = vld [vmem:[#allocation13] sm:$0x1]
        %v1140 = vlaneseq
        %v1141 = vshrl.u32 %v1140, 7
        %v1142 = vsub.s32 0, %v1141
        %v1143 = vrot.slane %v1138, %v1142
        %v1161 = vunpack.c.l.b16 %v1122
        %v1162 = vunpack.c.l.b16 %v1123
        %v1163 = vunpack.c.l.b16 %v1124
        %v1164 = vunpack.c.l.b16 %v1125
        %v1165 = vunpack.c.l.b16 %v1126
        %v1166 = vunpack.c.l.b16 %v1127
        %v1167 = vunpack.c.l.b16 %v1128
        %v1168 = vunpack.c.l.b16 %v1129
        %v1169 = vunpack.c.l.b16 %v1130
        %v1170 = vunpack.c.l.b16 %v1131
        %v1171 = vunpack.c.l.b16 %v1132
        %v1172 = vunpack.c.l.b16 %v1133
        %v1173 = vunpack.c.l.b16 %v1134
        %v1174 = vunpack.c.l.b16 %v1135
        %v1175 = vunpack.c.l.b16 %v1136
        %v1176 = vunpack.c.l.b16 %v1137
        %v1177 = vpack.c.b16 %v1162, %v1161
        %v1178 = vpack.c.b16 %v1164, %v1163
        %v1179 = vpack.c.b16 %v1166, %v1165
        %v1180 = vpack.c.b16 %v1168, %v1167
        %v1181 = vpack.c.b16 %v1170, %v1169
        %v1182 = vpack.c.b16 %v1172, %v1171
        %v1183 = vpack.c.b16 %v1174, %v1173
        %v1184 = vpack.c.b16 %v1176, %v1175
        %1193 = vmatprep.subr.bf16.mxu0 0
        %1194 = vmatpush1.bf16.msra.mxu0 %v1177
        %1195 = vmatprep.subr.bf16.mxu0 0
        %1196 = vmatpush1.bf16.msra.mxu0 %v1178
        %1197 = vmatprep.subr.bf16.mxu0 0
        %1198 = vmatpush1.bf16.msra.mxu0 %v1179
        %1199 = vmatprep.subr.bf16.mxu0 0
        %1200 = vmatpush1.bf16.msra.mxu0 %v1180
        %1201 = vmatprep.subr.bf16.mxu0 0
        %1202 = vmatpush1.bf16.msra.mxu0 %v1181
        %1203 = vmatprep.subr.bf16.mxu0 0
        %1204 = vmatpush1.bf16.msra.mxu0 %v1182
        %1205 = vmatprep.subr.bf16.mxu0 0
        %1206 = vmatpush1.bf16.msra.mxu0 %v1183
        %1207 = vmatprep.subr.bf16.mxu0 0
        %1208 = vmatpush1.bf16.msra.mxu0 %v1184
        %1209 = vmatprep.subr.bf16.mxu0 0
        %1210 = vmatpush1.bf16.msra.mxu0 0
        %1211 = vmatprep.subr.bf16.mxu0 0
        %1212 = vmatpush1.bf16.msra.mxu0 0
        %1213 = vmatprep.subr.bf16.mxu0 0
        %1214 = vmatpush1.bf16.msra.mxu0 0
        %1215 = vmatprep.subr.bf16.mxu0 0
        %1216 = vmatpush1.bf16.msra.mxu0 0
        %1217 = vmatprep.subr.bf16.mxu0 0
        %1218 = vmatpush1.bf16.msra.mxu0 0
        %1219 = vmatprep.subr.bf16.mxu0 0
        %1220 = vmatpush1.bf16.msra.mxu0 0
        %1221 = vmatprep.subr.bf16.mxu0 0
        %1222 = vmatpush1.bf16.msra.mxu0 0
        %1223 = vmatprep.subr.bf16.mxu0 0
        %1224 = vmatpush1.bf16.msra.mxu0 0
        %1225 = vmatprep.mubr.bf16.mxu0 0
        %1226 = vmatmul.mubr.bf16.gmra.mrb[0].mxu0 %v1114
        %v1227 = vpop.f32.mrb[0].mxu0
        %v1228 = vadd.f32 %v1143, %v1227
        %v1229 = vpop.f32.mrb[0].mxu0
        %v1230 = vpop.f32.mrb[0].mxu0
        %v1231 = vadd.f32 %v1143, %v1230
        %v1232 = vpop.f32.mrb[0].mxu0
        %1233 = vmatprep.mubr.bf16.mxu0 0
        %1234 = vmatmul.mubr.bf16.gmra.mrb[0].mxu0 %v1115
        %v1235 = vpop.f32.mrb[0].mxu0
        %v1236 = vadd.f32 %v1143, %v1235
        %v1237 = vpop.f32.mrb[0].mxu0
        %v1238 = vpop.f32.mrb[0].mxu0
        %v1239 = vadd.f32 %v1143, %v1238
        %v1240 = vpop.f32.mrb[0].mxu0
        %1241 = vmatprep.mubr.bf16.mxu0 0
        %1242 = vmatmul.mubr.bf16.gmra.mrb[0].mxu0 %v1116
        %v1243 = vpop.f32.mrb[0].mxu0
        %v1244 = vadd.f32 %v1143, %v1243
        %v1245 = vpop.f32.mrb[0].mxu0
        %v1246 = vpop.f32.mrb[0].mxu0
        %v1247 = vadd.f32 %v1143, %v1246
        %v1248 = vpop.f32.mrb[0].mxu0
        %1249 = vmatprep.mubr.bf16.mxu0 0
        %1250 = vmatmul.mubr.bf16.gmra.mrb[0].mxu0 %v1117
        %v1251 = vpop.f32.mrb[0].mxu0
        %v1252 = vadd.f32 %v1143, %v1251
        %v1253 = vpop.f32.mrb[0].mxu0
        %v1254 = vpop.f32.mrb[0].mxu0
        %v1255 = vadd.f32 %v1143, %v1254
        %v1256 = vpop.f32.mrb[0].mxu0
        %1257 = vmatprep.mubr.bf16.mxu0 0
        %1258 = vmatmul.mubr.bf16.gmra.mrb[0].mxu0 %v1118
        %v1259 = vpop.f32.mrb[0].mxu0
        %v1260 = vadd.f32 %v1143, %v1259
        %v1261 = vpop.f32.mrb[0].mxu0
        %v1262 = vpop.f32.mrb[0].mxu0
        %v1263 = vadd.f32 %v1143, %v1262
        %v1264 = vpop.f32.mrb[0].mxu0
        %1265 = vmatprep.mubr.bf16.mxu0 0
        %1266 = vmatmul.mubr.bf16.gmra.mrb[0].mxu0 %v1119
        %v1267 = vpop.f32.mrb[0].mxu0
        %v1268 = vadd.f32 %v1143, %v1267
        %v1269 = vpop.f32.mrb[0].mxu0
        %v1270 = vpop.f32.mrb[0].mxu0
        %v1271 = vadd.f32 %v1143, %v1270
        %v1272 = vpop.f32.mrb[0].mxu0
        %1273 = vmatprep.mubr.bf16.mxu0 0
        %1274 = vmatmul.mubr.bf16.gmra.mrb[0].mxu0 %v1120
        %v1275 = vpop.f32.mrb[0].mxu0
        %v1276 = vadd.f32 %v1143, %v1275
        %v1277 = vpop.f32.mrb[0].mxu0
        %v1278 = vpop.f32.mrb[0].mxu0
        %v1279 = vadd.f32 %v1143, %v1278
        %v1280 = vpop.f32.mrb[0].mxu0
        %1281 = vmatprep.mubr.bf16.mxu0 0
        %1282 = vmatmul.mubr.bf16.gmra.mrb[0].mxu0 %v1121
        %v1283 = vpop.f32.mrb[0].mxu0
        %v1284 = vadd.f32 %v1143, %v1283
        %v1285 = vpop.f32.mrb[0].mxu0
        %v1286 = vpop.f32.mrb[0].mxu0
        %v1287 = vadd.f32 %v1143, %v1286
        %v1288 = vpop.f32.mrb[0].mxu0
        %1289 = vdwg.mxu0
        %vm1290 = vcmask 261120
        %1291 = vst.msk [vmem:[%s478] sm:$0xff] %vm1290, %v1228
        %1292 = vst.msk [vmem:[%s478 + $0x8] sm:$0xff] %vm1290, %v1231
        %1293 = vst.msk [vmem:[%s478 + $0x10] sm:$0xff] %vm1290, %v1236
        %1294 = vst.msk [vmem:[%s478 + $0x18] sm:$0xff] %vm1290, %v1239
        %1295 = vst.msk [vmem:[%s478 + $0x20] sm:$0xff] %vm1290, %v1244
        %1296 = vst.msk [vmem:[%s478 + $0x28] sm:$0xff] %vm1290, %v1247
        %1297 = vst.msk [vmem:[%s478 + $0x30] sm:$0xff] %vm1290, %v1252
        %1298 = vst.msk [vmem:[%s478 + $0x38] sm:$0xff] %vm1290, %v1255
        %1299 = vst.msk [vmem:[%s478 + $0x40] sm:$0xff] %vm1290, %v1260
        %1300 = vst.msk [vmem:[%s478 + $0x48] sm:$0xff] %vm1290, %v1263
        %1301 = vst.msk [vmem:[%s478 + $0x50] sm:$0xff] %vm1290, %v1268
        %1302 = vst.msk [vmem:[%s478 + $0x58] sm:$0xff] %vm1290, %v1271
        %1303 = vst.msk [vmem:[%s478 + $0x60] sm:$0xff] %vm1290, %v1276
        %1304 = vst.msk [vmem:[%s478 + $0x68] sm:$0xff] %vm1290, %v1279
        %1305 = vst.msk [vmem:[%s478 + $0x70] sm:$0xff] %vm1290, %v1284
        %1306 = vst.msk [vmem:[%s478 + $0x78] sm:$0xff] %vm1290, %v1287
        %s1307 = sand.u32 %s235, 1
        %s1308 = scalar_lea.sflag [#allocation4], %s1307
        %s1309 = sand.u32 %s235, 1
        %s1310 = smul.addr %s1309, 128
        %s1311 = scalar_lea.vmem [#allocation14], %s1310
        // Predicated region
        $region77: #{mixffn_forward.3} parent=47 // pred_check
          %p1312 = pneg %p245
        $region78: #{mixffn_forward.3} parent=47 // pred_check_branch
          %1314 = sbr.rel (%p1312) target = $region80
        $region79: #{mixffn_forward.3} parent=47 // pred_region
          %s1315 = smul.u32 8, %s34
          %s1317 = ssub.s32 2048, 2048
          %1318 = vsyncadd %s1308, %s1317
          %s1319 = smul.addr %s1315, 2
          %s1320 = smul.addr %s33, 32
          %s1321 = sadd.s32 %s1319, %s1320
          %s1322 = smul.addr %s1321, 128
          %s1323 = scalar_lea.hbm %s7, %s1322
          %s1324 = sshll.u32 %s1311, 4
          %s1325 = int_to_ptr.vmem [resolvable:$true] %s1324
          %1330 = dma.vmem_to_hbm [thread:$0]  %s1325, 2048, %s1323, %s1308, 128, 128, 8
        $region80: #{mixffn_forward.3} parent=47 // pred_fallthru
          _
      $region48: #{mixffn_forward.3} parent=5 // pred_fallthru
        _
      %p1331 = scmp.le.s32.totalorder 2, %s24
      // Predicated region
      $region81: #{mixffn_forward.3} parent=5 // pred_check
        %p1332 = pneg %p1331
      $region82: #{mixffn_forward.3} parent=5 // pred_check_branch
        %1334 = sbr.rel (%p1332) target = $region84
      $region83: #{mixffn_forward.3} parent=5 // pred_region
        %s1335 = ssub.s32 %s24, 2
        // Predicated region
        $region85: #{mixffn_forward.3} parent=83 // pred_check
          %p1336 = pneg %p251
        $region86: #{mixffn_forward.3} parent=83 // pred_check_branch
          %1338 = sbr.rel (%p1336) target = $region88
        $region87: #{mixffn_forward.3} parent=83 // pred_region
          %s1339 = sand.u32 %s236, 1
          %s1340 = scalar_lea.sflag [#allocation4], %s1339
          %s1341 = sand.u32 %s236, 1
          %s1342 = smul.addr %s1341, 128
          %s1343 = scalar_lea.vmem [#allocation14], %s1342
          %1344 = dma.done %s1340, 2048
        $region88: #{mixffn_forward.3} parent=83 // pred_fallthru
          _
      $region84: #{mixffn_forward.3} parent=5 // pred_fallthru
        _
    $region6: #{mixffn_forward.3} parent=1 // loop_footer
      %s28 = sadd.s32 1, %s24
    $region7: #{mixffn_forward.3} parent=1 // loop_footer_branch
      %23 = sbr.rel target = $region3
    $region8: #{mixffn_forward.3} parent=1 // loop_exit
      _
    %1345 = vsyncpa [#allocation3], 1
    %s1346 = scalar_lea.sflag [#allocation3], 1
    %1347 = vsyncpa %s1346, 1
    %1348 = vsyncpa [#allocation6], 1
    %s1349 = scalar_lea.sflag [#allocation6], 1
    %1350 = vsyncpa %s1349, 1
    %1351 = vsyncpa [#allocation9], 1
    %1352 = vsyncpa [#allocation12], 1
    %1353 = vsyncpa [#allocation4], 1
    %s1354 = scalar_lea.sflag [#allocation4], 1
    %1355 = vsyncpa %s1354, 1

</llo_original>
